<compile_context>
chip_gen: v7x
topology: tpu7x:2x2x1
jax: 0.10.0
libtpu: 0.0.40
codegen_flags: <defaults>
</compile_context>

<pallas_src>
import functools

import jax
import jax.numpy as jnp
import numpy as np
from jax.experimental import pallas as pl
from jax.experimental.pallas import tpu as pltpu

_LANE = 128
_SUBLANE = 8


def _round_up(v, m):
    return (v + m - 1) // m * m


def _cdiv(a, b):
    return (a + b - 1) // b


def _vmem_budget_bytes():
    """Per-generation VMEM budget (review: no hard 48 MiB clamp)."""
    try:
        cap = getattr(pltpu.get_tpu_info(), "vmem_capacity_bytes", None)
        if cap:
            return int(cap * 0.85)          # ~109 MiB on v5e/v6e, ~54 MiB on v7x
    except Exception:
        pass
    return 48 * 1024 * 1024                 # conservative fallback, safe on v7x


def _conv_bn_silu_kernel(x_hbm, w_ref, bias_ref, o_ref, buf, sem, *, k, unroll):
    """One (batch, row-block) grid step.

    x_hbm:    (N, H_t + 2p, W_t, Kp)   folded/padded NHWC input, stays in HBM (bf16)
    w_ref:    (k, Kp, C2p)             per-kh folded weights, BN scale pre-applied (bf16)
    bias_ref: (1, C2p)                 folded BN bias (f32)
    o_ref:    (1, TH, W_t, C2p)        output row-block (bf16)
    buf:      (2, TH + 2p, W_t, Kp)    double-buffered halo slabs (VMEM, bf16)
    sem:      DMA semaphores, shape (2,)
    """
    n = pl.program_id(0)
    h = pl.program_id(1)
    n_h = pl.num_programs(1)

    _, TH, W_t, C2p = o_ref.shape
    halo = buf.shape[1]
    Kp = buf.shape[3]
    slot = h % 2

    def start_fetch(hh, s):
        pltpu.make_async_copy(
            x_hbm.at[n, pl.ds(hh * TH, halo)], buf.at[s], sem.at[s]).start()

    # Prime at the first row-block of each image (correct under any megacore
    # split of the parallel batch axis), then prefetch the next row-block so the
    # DMA overlaps this step's compute.  No prefetch across the image boundary
    # keeps semaphore counts balanced.
    @pl.when(h == 0)
    def _():
        start_fetch(0, slot)

    @pl.when(h + 1 < n_h)
    def _():
        start_fetch(h + 1, 1 - slot)

    pltpu.make_async_copy(
        x_hbm.at[n, pl.ds(0, halo)], buf.at[slot], sem.at[slot]).wait()

    x_cur = buf.at[slot]

    def tap(kh):
        # Full-width, full-K slab: the kh slice is along an axis above the
        # (sublane, lane) tile, so it is alignment-free (no relayout copy), and
        # the reshape to (TH*W_t, Kp) is contiguous.
        xs = x_cur[pl.ds(kh, TH), :, :].reshape(TH * W_t, Kp)
        return jnp.dot(xs, w_ref[kh], preferred_element_type=jnp.float32)

    if unroll:
        acc = tap(0)
        for kh in range(1, k):
            acc = acc + tap(kh)
    else:
        # TODO(synk): for dense large-k (not used by RepLKBlock, whose 31x31 conv
        # is depthwise) stream a per-kh weight slab from HBM instead of keeping
        # all k taps resident in VMEM.
        acc = jax.lax.fori_loop(1, k, lambda kh, a: a + tap(kh), tap(0))

    # Fused BN bias + SiLU epilogue in fp32 (sigmoid lands on the EUP slot).
    y = acc + bias_ref[...]
    y = y * jax.nn.sigmoid(y)
    o_ref[...] = y.reshape(1, TH, W_t, C2p).astype(o_ref.dtype)


def conv_bn_silu(x_nchw, weight_oihw, gamma, beta, running_mean, running_var,
                 eps=1e-5, row_tile=None):
    """Equivalent of Conv.forward (conv -> BN(eval) -> SiLU). stride=1, groups=1."""
    N, C1, H, W = x_nchw.shape
    C2, C1_w, k, k2 = weight_oihw.shape
    assert C1_w == C1 and k == k2 and k % 2 == 1, "stride=1, groups=1, odd k only"
    # TODO(synk): stride!=1 and grouped / depthwise (groups=C) Conv variants are
    # not covered here; RepLKBlock's depthwise large-kernel conv needs its own kernel.
    p = k // 2

    Kfold = k * C1                         # kw taps folded into the contraction dim
    Kp = _round_up(Kfold, _LANE)
    C2p = _round_up(C2, _LANE)
    W_t = _round_up(W, _SUBLANE)

    # Row tile: target >= ~512 MXU rows per matmul, then shrink to the VMEM budget.
    if row_tile is None:
        TH = _round_up(max(_SUBLANE, _cdiv(512, W_t)), _SUBLANE)
    else:
        TH = _round_up(max(int(row_tile), _SUBLANE), _SUBLANE)
    TH = min(TH, _round_up(H, _SUBLANE))

    single_buf_consts = hasattr(pl, "Buffered")
    w_bufs = 1 if single_buf_consts else 2

    def vmem_needed(th):
        halo_rows = th + 2 * p
        return (2 * halo_rows * W_t * Kp * 2        # manual double-buffered input slabs
                + 2 * th * W_t * C2p * 2            # pipelined bf16 output blocks
                + w_bufs * k * Kp * C2p * 2         # resident folded weights
                + w_bufs * C2p * 4                  # bias
                + th * W_t * (C2p * 4 + Kp * 2))    # live fp32 accumulator + one slab value

    budget = _vmem_budget_bytes()
    while TH > _SUBLANE and vmem_needed(TH) > int(0.8 * budget):
        TH -= _SUBLANE

    H_t = _round_up(H, TH)
    n_h = H_t // TH
    halo = TH + 2 * p

    # --- glue (plain JAX): layout, width-im2col fold, padding, BN folding ---
    # TODO(synk): keep activations NHWC end-to-end across the surrounding block so
    # this transpose/pad/cast pass over the activation tensor disappears.
    x = jnp.transpose(x_nchw, (0, 2, 3, 1))                        # NHWC
    x = jnp.pad(x, ((0, 0), (p, p + (H_t - H)), (p, p), (0, 0)))   # spatial halo
    # Fold the k kw-shifts into the channel axis: (N, H_t+2p, W, k*C1), kw-major.
    x = jnp.concatenate([x[:, :, kw:kw + W, :] for kw in range(k)], axis=-1)
    x = jnp.pad(x, ((0, 0), (0, 0), (0, W_t - W), (0, Kp - Kfold)))
    x = x.astype(jnp.bfloat16)

    inv = (gamma / jnp.sqrt(running_var + eps)).astype(jnp.float32)
    w = jnp.transpose(weight_oihw, (2, 3, 1, 0)).astype(jnp.float32)   # (kh, kw, C1, C2)
    w = w.reshape(k, Kfold, C2) * inv[None, None, :]                   # fold BN scale in
    w = jnp.pad(w, ((0, 0), (0, Kp - Kfold), (0, C2p - C2))).astype(jnp.bfloat16)
    # TODO(synk): on v7x, evaluate e4m3 weights here (fp8 MXU path) behind an accuracy gate.

    bias = (jnp.pad(beta - running_mean * inv, (0, C2p - C2))
            .reshape(1, C2p).astype(jnp.float32))

    needed = vmem_needed(TH)
    vmem_limit = int(min(budget, max(32 * 1024 * 1024, 2 * needed)))

    cost = pl.CostEstimate(
        flops=2 * N * H_t * W_t * Kp * C2p * k,
        transcendentals=N * H_t * W_t * C2p,
        bytes_accessed=x.size * 2 + w.size * 2 + N * H_t * W_t * C2p * 2)

    const_kwargs = {"pipeline_mode": pl.Buffered(1)} if single_buf_consts else {}

    out = pl.pallas_call(
        functools.partial(_conv_bn_silu_kernel, k=k, unroll=(k <= 8)),
        out_shape=jax.ShapeDtypeStruct((N, H_t, W_t, C2p), jnp.bfloat16),
        grid=(N, n_h),
        in_specs=[
            # Activations stay in HBM; halo row-slabs are DMA'd manually per step.
            pl.BlockSpec(memory_space=pl.ANY),
            # Grid-invariant operands: fetched once, single-buffered when supported.
            pl.BlockSpec((k, Kp, C2p), lambda n, h: (0, 0, 0), **const_kwargs),
            pl.BlockSpec((1, C2p), lambda n, h: (0, 0), **const_kwargs),
        ],
        out_specs=pl.BlockSpec((1, TH, W_t, C2p), lambda n, h: (n, h, 0, 0)),
        scratch_shapes=[
            pltpu.VMEM((2, halo, W_t, Kp), jnp.bfloat16),
            pltpu.SemaphoreType.DMA((2,)),
        ],
        compiler_params=pltpu.CompilerParams(
            # Batch axis parallel (N * n_h >= 2 keeps both v7x TCs busy for N>=2),
            # row-block axis arbitrary (it carries the manual DMA pipeline).
            dimension_semantics=("parallel", "arbitrary"),
            vmem_limit_bytes=vmem_limit),
        cost_estimate=cost,
    )(x, w, bias)

    out = out[:, :H, :W, :C2]                                   # drop alignment padding
    return jnp.transpose(out, (0, 3, 1, 2)).astype(x_nchw.dtype)  # back to NCHW


def _reference(x_nchw, weight_oihw, gamma, beta, mean, var, eps=1e-5):
    y = jax.lax.conv_general_dilated(
        x_nchw, weight_oihw, window_strides=(1, 1), padding="SAME",
        dimension_numbers=("NCHW", "OIHW", "NCHW"))
    s = (gamma / jnp.sqrt(var + eps)).reshape(1, -1, 1, 1)
    b = (beta - mean * gamma / jnp.sqrt(var + eps)).reshape(1, -1, 1, 1)
    y = y * s + b
    return y * jax.nn.sigmoid(y)


if __name__ == "__main__":
    # Conv(c1=4, c2=8, k=3) on a (2, 4, 16, 16) input (RepLKBlock-style Conv block).
    N, C1, C2, H, W, k = 2, 4, 8, 16, 16, 3

    key = jax.random.PRNGKey(0)
    kx, kw_, kg, kb, km, kv = jax.random.split(key, 6)
    x = jax.random.normal(kx, (N, C1, H, W), jnp.float32)
    weight = jax.random.normal(kw_, (C2, C1, k, k), jnp.float32) * 0.1
    gamma = 1.0 + 0.1 * jax.random.normal(kg, (C2,), jnp.float32)
    beta = 0.1 * jax.random.normal(kb, (C2,), jnp.float32)
    running_mean = 0.1 * jax.random.normal(km, (C2,), jnp.float32)
    running_var = jnp.abs(jax.random.normal(kv, (C2,), jnp.float32)) + 0.5

    out = conv_bn_silu(x, weight, gamma, beta, running_mean, running_var)
    out = jax.block_until_ready(out)

    ref = _reference(x, weight, gamma, beta, running_mean, running_var)
    # bf16 matmul operands / bf16 output with fp32 accumulation -> compare at
    # bf16-level tolerance (intentionally not bit-exact vs the fp32 reference).
    np.testing.assert_allclose(np.asarray(out), np.asarray(ref),
                               rtol=3e-2, atol=3e-2)
    print("KERNEL_OK")
</pallas_src>

<mosaic_0001>
module attributes {stable_mosaic.version = 11 : i64} {
  func.func @_conv_bn_silu_kernel(%arg0: i32, %arg1: i32, %arg2: memref<2x18x16x128xbf16, #tpu.memory_space<any>>, %arg3: memref<3x128x128xbf16, #tpu.memory_space<vmem>>, %arg4: memref<1x128xf32, #tpu.memory_space<vmem>>, %arg5: memref<1x16x16x128xbf16, #tpu.memory_space<vmem>>, %arg6: memref<2x18x16x128xbf16, #tpu.memory_space<vmem>>, %arg7: memref<2x!tpu.dma_semaphore, #tpu.memory_space<semaphore_mem>>) attributes {dimension_semantics = [#tpu.dimension_semantics<parallel>, #tpu.dimension_semantics<arbitrary>], iteration_bounds = array<i64: 2, 1>, scalar_prefetch = 0 : i64, scratch_operands = 2 : i64, tpu.core_type = #tpu.core_type<tc>, window_params = [{}, {pipeline_mode = #tpu.pipeline_mode<synchronous>, transform_indices = @transform_1, window_bounds = array<i64: 3, 128, 128>}, {pipeline_mode = #tpu.pipeline_mode<synchronous>, transform_indices = @transform_2, window_bounds = array<i64: 1, 128>}, {transform_indices = @transform_3, window_bounds = array<i64: 1, 16, 16, 128>}]} {
    %c2_i32 = arith.constant 2 : i32
    %c0_i32 = arith.constant 0 : i32
    %0 = arith.cmpi eq, %c2_i32, %c0_i32 : i32
    %c1_i32 = arith.constant 1 : i32
    %1 = arith.select %0, %c1_i32, %c2_i32 : i32
    %2 = arith.remsi %arg1, %1 : i32
    %c0_i32_0 = arith.constant 0 : i32
    %3 = arith.cmpi ne, %2, %c0_i32_0 : i32
    %c0_i32_1 = arith.constant 0 : i32
    %4 = arith.cmpi slt, %2, %c0_i32_1 : i32
    %c0_i32_2 = arith.constant 0 : i32
    %5 = arith.cmpi slt, %1, %c0_i32_2 : i32
    %6 = arith.xori %4, %5 : i1
    %7 = arith.andi %6, %3 : i1
    %8 = arith.addi %2, %1 : i32
    %9 = arith.select %7, %8, %2 : i32
    %c0_i32_3 = arith.constant 0 : i32
    %10 = arith.cmpi eq, %arg1, %c0_i32_3 : i32
    %11 = arith.extui %10 : i1 to i32
    %c0_i32_4 = arith.constant 0 : i32
    %12 = arith.cmpi ne, %11, %c0_i32_4 : i32
    scf.if %12 {
      %c0_i32_47 = arith.constant 0 : i32
      %c0_i32_48 = arith.constant 0 : i32
      %c0_i32_49 = arith.constant 0 : i32
      %58 = tpu.memref_slice %arg2[%arg0, %c0_i32_47, %c0_i32_48, %c0_i32_49] : memref<2x18x16x128xbf16, #tpu.memory_space<any>> -> memref<1x18x16x128xbf16, #tpu.memory_space<any>>
      %59 = tpu.memref_squeeze %58 : memref<1x18x16x128xbf16, #tpu.memory_space<any>> -> memref<18x16x128xbf16, #tpu.memory_space<any>>
      %c0_i32_50 = arith.constant 0 : i32
      %c0_i32_51 = arith.constant 0 : i32
      %c0_i32_52 = arith.constant 0 : i32
      %60 = tpu.memref_slice %arg6[%9, %c0_i32_50, %c0_i32_51, %c0_i32_52] : memref<2x18x16x128xbf16, #tpu.memory_space<vmem>> -> memref<1x18x16x128xbf16, #tpu.memory_space<vmem>>
      %61 = tpu.memref_squeeze %60 : memref<1x18x16x128xbf16, #tpu.memory_space<vmem>> -> memref<18x16x128xbf16, #tpu.memory_space<vmem>>
      %62 = tpu.memref_slice %arg7[%9] : memref<2x!tpu.dma_semaphore, #tpu.memory_space<semaphore_mem>> -> memref<1x!tpu.dma_semaphore, #tpu.memory_space<semaphore_mem>>
      %63 = tpu.memref_squeeze %62 : memref<1x!tpu.dma_semaphore, #tpu.memory_space<semaphore_mem>> -> memref<!tpu.dma_semaphore, #tpu.memory_space<semaphore_mem>>
      tpu.enqueue_dma source(%59 : memref<18x16x128xbf16, #tpu.memory_space<any>>) target(%61 : memref<18x16x128xbf16, #tpu.memory_space<vmem>>) target_semaphore(%63 : memref<!tpu.dma_semaphore, #tpu.memory_space<semaphore_mem>>)
    } else {
    }
    %c1_i32_5 = arith.constant 1 : i32
    %13 = arith.addi %arg1, %c1_i32_5 : i32
    %c1_i32_6 = arith.constant 1 : i32
    %14 = arith.cmpi slt, %13, %c1_i32_6 : i32
    %15 = arith.extui %14 : i1 to i32
    %c0_i32_7 = arith.constant 0 : i32
    %16 = arith.cmpi ne, %15, %c0_i32_7 : i32
    scf.if %16 {
      %c1_i32_47 = arith.constant 1 : i32
      %58 = arith.addi %arg1, %c1_i32_47 : i32
      %c1_i32_48 = arith.constant 1 : i32
      %59 = arith.subi %c1_i32_48, %9 : i32
      %c16_i32 = arith.constant 16 : i32
      %60 = arith.muli %58, %c16_i32 : i32
      %c0_i32_49 = arith.constant 0 : i32
      %c0_i32_50 = arith.constant 0 : i32
      %61 = tpu.memref_slice %arg2[%arg0, %60, %c0_i32_49, %c0_i32_50] : memref<2x18x16x128xbf16, #tpu.memory_space<any>> -> memref<1x18x16x128xbf16, #tpu.memory_space<any>>
      %62 = tpu.memref_squeeze %61 : memref<1x18x16x128xbf16, #tpu.memory_space<any>> -> memref<18x16x128xbf16, #tpu.memory_space<any>>
      %c0_i32_51 = arith.constant 0 : i32
      %c0_i32_52 = arith.constant 0 : i32
      %c0_i32_53 = arith.constant 0 : i32
      %63 = tpu.memref_slice %arg6[%59, %c0_i32_51, %c0_i32_52, %c0_i32_53] : memref<2x18x16x128xbf16, #tpu.memory_space<vmem>> -> memref<1x18x16x128xbf16, #tpu.memory_space<vmem>>
      %64 = tpu.memref_squeeze %63 : memref<1x18x16x128xbf16, #tpu.memory_space<vmem>> -> memref<18x16x128xbf16, #tpu.memory_space<vmem>>
      %65 = tpu.memref_slice %arg7[%59] : memref<2x!tpu.dma_semaphore, #tpu.memory_space<semaphore_mem>> -> memref<1x!tpu.dma_semaphore, #tpu.memory_space<semaphore_mem>>
      %66 = tpu.memref_squeeze %65 : memref<1x!tpu.dma_semaphore, #tpu.memory_space<semaphore_mem>> -> memref<!tpu.dma_semaphore, #tpu.memory_space<semaphore_mem>>
      tpu.enqueue_dma source(%62 : memref<18x16x128xbf16, #tpu.memory_space<any>>) target(%64 : memref<18x16x128xbf16, #tpu.memory_space<vmem>>) target_semaphore(%66 : memref<!tpu.dma_semaphore, #tpu.memory_space<semaphore_mem>>)
    } else {
    }
    %c0_i32_8 = arith.constant 0 : i32
    %c0_i32_9 = arith.constant 0 : i32
    %c0_i32_10 = arith.constant 0 : i32
    %17 = tpu.memref_slice %arg2[%arg0, %c0_i32_8, %c0_i32_9, %c0_i32_10] : memref<2x18x16x128xbf16, #tpu.memory_space<any>> -> memref<1x18x16x128xbf16, #tpu.memory_space<any>>
    %18 = tpu.memref_squeeze %17 : memref<1x18x16x128xbf16, #tpu.memory_space<any>> -> memref<18x16x128xbf16, #tpu.memory_space<any>>
    %c0_i32_11 = arith.constant 0 : i32
    %c0_i32_12 = arith.constant 0 : i32
    %c0_i32_13 = arith.constant 0 : i32
    %19 = tpu.memref_slice %arg6[%9, %c0_i32_11, %c0_i32_12, %c0_i32_13] : memref<2x18x16x128xbf16, #tpu.memory_space<vmem>> -> memref<1x18x16x128xbf16, #tpu.memory_space<vmem>>
    %20 = tpu.memref_squeeze %19 : memref<1x18x16x128xbf16, #tpu.memory_space<vmem>> -> memref<18x16x128xbf16, #tpu.memory_space<vmem>>
    %21 = tpu.memref_slice %arg7[%9] : memref<2x!tpu.dma_semaphore, #tpu.memory_space<semaphore_mem>> -> memref<1x!tpu.dma_semaphore, #tpu.memory_space<semaphore_mem>>
    %22 = tpu.memref_squeeze %21 : memref<1x!tpu.dma_semaphore, #tpu.memory_space<semaphore_mem>> -> memref<!tpu.dma_semaphore, #tpu.memory_space<semaphore_mem>>
    tpu.wait_dma2 semaphore(%22 : memref<!tpu.dma_semaphore, #tpu.memory_space<semaphore_mem>>) src(%18 : memref<18x16x128xbf16, #tpu.memory_space<any>>) dst(%20 : memref<18x16x128xbf16, #tpu.memory_space<vmem>>)
    %c0_i32_14 = arith.constant 0 : i32
    %c0_i32_15 = arith.constant 0 : i32
    %c0_i32_16 = arith.constant 0 : i32
    %23 = tpu.memref_slice %arg6[%9, %c0_i32_14, %c0_i32_15, %c0_i32_16] : memref<2x18x16x128xbf16, #tpu.memory_space<vmem>> -> memref<1x18x16x128xbf16, #tpu.memory_space<vmem>>
    %24 = tpu.memref_squeeze %23 : memref<1x18x16x128xbf16, #tpu.memory_space<vmem>> -> memref<18x16x128xbf16, #tpu.memory_space<vmem>>
    %c0 = arith.constant 0 : index
    %c0_17 = arith.constant 0 : index
    %c0_18 = arith.constant 0 : index
    %25 = vector.load %24[%c0, %c0_17, %c0_18] : memref<18x16x128xbf16, #tpu.memory_space<vmem>>, vector<16x16x128xbf16>
    %26 = vector.shape_cast %25 : vector<16x16x128xbf16> to vector<256x128xbf16>
    %c0_19 = arith.constant 0 : index
    %c0_20 = arith.constant 0 : index
    %c0_21 = arith.constant 0 : index
    %27 = vector.load %arg3[%c0_19, %c0_20, %c0_21] : memref<3x128x128xbf16, #tpu.memory_space<vmem>>, vector<1x128x128xbf16>
    %28 = vector.shape_cast %27 : vector<1x128x128xbf16> to vector<128x128xbf16>
    %cst = arith.constant dense<0.000000e+00> : vector<256x128xf32>
    %29 = tpu.matmul %26, %28, %cst {dimension_numbers = #tpu.dot_dimension_numbers<[1], [0], [0], [1], [0, 0, 1, 1], [], []>} : vector<256x128xbf16>, vector<128x128xbf16>, vector<256x128xf32> -> vector<256x128xf32>
    %c0_i32_22 = arith.constant 0 : i32
    %c0_i32_23 = arith.constant 0 : i32
    %c0_i32_24 = arith.constant 0 : i32
    %30 = tpu.memref_slice %arg6[%9, %c0_i32_22, %c0_i32_23, %c0_i32_24] : memref<2x18x16x128xbf16, #tpu.memory_space<vmem>> -> memref<1x18x16x128xbf16, #tpu.memory_space<vmem>>
    %31 = tpu.memref_squeeze %30 : memref<1x18x16x128xbf16, #tpu.memory_space<vmem>> -> memref<18x16x128xbf16, #tpu.memory_space<vmem>>
    %c1 = arith.constant 1 : index
    %c0_25 = arith.constant 0 : index
    %c0_26 = arith.constant 0 : index
    %32 = vector.load %31[%c1, %c0_25, %c0_26] : memref<18x16x128xbf16, #tpu.memory_space<vmem>>, vector<16x16x128xbf16>
    %33 = vector.shape_cast %32 : vector<16x16x128xbf16> to vector<256x128xbf16>
    %c1_27 = arith.constant 1 : index
    %c0_28 = arith.constant 0 : index
    %c0_29 = arith.constant 0 : index
    %34 = vector.load %arg3[%c1_27, %c0_28, %c0_29] : memref<3x128x128xbf16, #tpu.memory_space<vmem>>, vector<1x128x128xbf16>
    %35 = vector.shape_cast %34 : vector<1x128x128xbf16> to vector<128x128xbf16>
    %cst_30 = arith.constant dense<0.000000e+00> : vector<256x128xf32>
    %36 = tpu.matmul %33, %35, %cst_30 {dimension_numbers = #tpu.dot_dimension_numbers<[1], [0], [0], [1], [0, 0, 1, 1], [], []>} : vector<256x128xbf16>, vector<128x128xbf16>, vector<256x128xf32> -> vector<256x128xf32>
    %37 = arith.addf %29, %36 : vector<256x128xf32>
    %c0_i32_31 = arith.constant 0 : i32
    %c0_i32_32 = arith.constant 0 : i32
    %c0_i32_33 = arith.constant 0 : i32
    %38 = tpu.memref_slice %arg6[%9, %c0_i32_31, %c0_i32_32, %c0_i32_33] : memref<2x18x16x128xbf16, #tpu.memory_space<vmem>> -> memref<1x18x16x128xbf16, #tpu.memory_space<vmem>>
    %39 = tpu.memref_squeeze %38 : memref<1x18x16x128xbf16, #tpu.memory_space<vmem>> -> memref<18x16x128xbf16, #tpu.memory_space<vmem>>
    %c2 = arith.constant 2 : index
    %c0_34 = arith.constant 0 : index
    %c0_35 = arith.constant 0 : index
    %40 = vector.load %39[%c2, %c0_34, %c0_35] : memref<18x16x128xbf16, #tpu.memory_space<vmem>>, vector<16x16x128xbf16>
    %41 = vector.shape_cast %40 : vector<16x16x128xbf16> to vector<256x128xbf16>
    %c2_36 = arith.constant 2 : index
    %c0_37 = arith.constant 0 : index
    %c0_38 = arith.constant 0 : index
    %42 = vector.load %arg3[%c2_36, %c0_37, %c0_38] : memref<3x128x128xbf16, #tpu.memory_space<vmem>>, vector<1x128x128xbf16>
    %43 = vector.shape_cast %42 : vector<1x128x128xbf16> to vector<128x128xbf16>
    %cst_39 = arith.constant dense<0.000000e+00> : vector<256x128xf32>
    %44 = tpu.matmul %41, %43, %cst_39 {dimension_numbers = #tpu.dot_dimension_numbers<[1], [0], [0], [1], [0, 0, 1, 1], [], []>} : vector<256x128xbf16>, vector<128x128xbf16>, vector<256x128xf32> -> vector<256x128xf32>
    %45 = arith.addf %37, %44 : vector<256x128xf32>
    %c0_40 = arith.constant 0 : index
    %c0_41 = arith.constant 0 : index
    %46 = vector.load %arg4[%c0_40, %c0_41] : memref<1x128xf32, #tpu.memory_space<vmem>>, vector<1x128xf32>
    %47 = vector.broadcast %46 : vector<1x128xf32> to vector<256x128xf32>
    %48 = arith.addf %45, %47 : vector<256x128xf32>
    %49 = arith.negf %48 : vector<256x128xf32>
    %50 = math.exp %49 : vector<256x128xf32>
    %cst_42 = arith.constant 1.000000e+00 : f32
    %51 = vector.broadcast %cst_42 : f32 to vector<256x128xf32>
    %52 = arith.addf %51, %50 : vector<256x128xf32>
    %53 = arith.divf %51, %52 : vector<256x128xf32>
    %54 = arith.mulf %48, %53 : vector<256x128xf32>
    %55 = vector.shape_cast %54 : vector<256x128xf32> to vector<1x16x16x128xf32>
    %56 = arith.truncf %55 : vector<1x16x16x128xf32> to vector<1x16x16x128xbf16>
    %c0_43 = arith.constant 0 : index
    %c0_44 = arith.constant 0 : index
    %c0_45 = arith.constant 0 : index
    %c0_46 = arith.constant 0 : index
    %57 = vector.load %arg5[%c0_43, %c0_44, %c0_45, %c0_46] : memref<1x16x16x128xbf16, #tpu.memory_space<vmem>>, vector<1x16x16x128xbf16>
    tpu.vector_store %arg5[%c0_43, %c0_44, %c0_45, %c0_46], %56 {strides = array<i32>} : memref<1x16x16x128xbf16, #tpu.memory_space<vmem>>, vector<1x16x16x128xbf16>,
    return
  }
  func.func @transform_1(%arg0: i32, %arg1: i32) -> (i32, i32, i32) {
    %c0_i32 = arith.constant 0 : i32
    %c0_i32_0 = arith.constant 0 : i32
    %c0_i32_1 = arith.constant 0 : i32
    %c0_i32_2 = arith.constant 0 : i32
    return %c0_i32, %c0_i32_0, %c0_i32_1 : i32, i32, i32
  }
  func.func @transform_2(%arg0: i32, %arg1: i32) -> (i32, i32) {
    %c0_i32 = arith.constant 0 : i32
    %c0_i32_0 = arith.constant 0 : i32
    %c0_i32_1 = arith.constant 0 : i32
    return %c0_i32, %c0_i32_0 : i32, i32
  }
  func.func @transform_3(%arg0: i32, %arg1: i32) -> (i32, i32, i32, i32) {
    %c0_i32 = arith.constant 0 : i32
    %c0_i32_0 = arith.constant 0 : i32
    %c0_i32_1 = arith.constant 0 : i32
    return %arg0, %arg1, %c0_i32, %c0_i32_0 : i32, i32, i32, i32
  }
}

</mosaic_0001>

<llo_original>
// kernel: tpu_custom_call.1
$region0: #{tpu_custom_call.1}
  #allocation0 [shape = 'u32[]', space=smem, size = 0x4, offset = 0x4, fixed_abs, tag = 'smem constant byte address 0x4 - core index']
  #allocation1 [shape = 'u32[144,128]{1,0:T(1,128)}', space=vmem, size = 0x12000, scoped, tag = 'internal scratch']
  #allocation2 [shape = 'bf16[2,18,16,128]{3,2,1,0:T(16,128)(2,1)}', space=vmem, size = 0x24000, scoped, tag = 'scratch operand']
  #allocation3 [shape = 's32[2]{0}', space=sflag, size = 0x8, scoped, tag = 'scratch operand']
  #allocation8 [shape = 's32[]', space=sflag, size = 0x4, offset = 0, fixed_abs, tag = 'sflag constant byte address 0x0 - dummy sync flag']
  #allocation9 [shape = 's32[]', space=sflag, size = 0x4, offset = 0, fixed_abs, tag = 'sflag constant byte address 0x0 - dummy sync flag']
  #allocation10 [shape = 'u32[]', space=smem, size = 0x4, offset = 0x44, fixed_abs, tag = 'smem constant byte address 0x44 - assertion arg 0']
  #allocation11 [shape = 'u32[]', space=smem, size = 0x4, offset = 0x48, fixed_abs, tag = 'smem constant byte address 0x48 - assertion arg 1']
  #allocation12 [shape = 's32[]', space=sflag, size = 0x4, offset = 0, fixed_abs, tag = 'sflag constant byte address 0x0 - dummy sync flag']
  #allocation13 [shape = 's32[]', space=sflag, size = 0x4, offset = 0, fixed_abs, tag = 'sflag constant byte address 0x0 - dummy sync flag']
  %s0 = inlined_call_operand.hbm [shape: bf16[2,18,16,128], index: 0, kind: input, shape index: {}]
  %s1 = inlined_call_operand.hbm [shape: bf16[3,128,128], index: 1, kind: input, shape index: {}]
  %s2 = inlined_call_operand.vmem [shape: f32[1,128], index: 2, kind: input, shape index: {}]
  %s3 = inlined_call_operand.hbm [shape: bf16[2,16,16,128], index: 3, kind: output, shape index: {}]
  %s4 = sld [smem:[#allocation0]]
  $region61: #{tpu_custom_call.1} parent=0
    _
  %s6 = ssub.s32 1, %s4
  %s7 = scalar_select 0, %s6, %s4
  $region1: #{tpu_custom_call.1} parent=0
    #allocation4 [shape = 'u8[98304]{0}', space=vmem, size = 0x18000, scoped, tag = 'input window, operand 1, single buffered']
    #allocation5 [shape = 's32[2]{0}', space=sflag, size = 0x8, scoped, tag = 'scoped memory for tpu_custom_call.1']
    #allocation6 [shape = 's32[2]{0}', space=sflag, size = 0x8, scoped, tag = 'scoped memory for tpu_custom_call.1']
    #allocation7 [shape = 'u8[131072]{0}', space=vmem, size = 0x20000, scoped, tag = 'output window, operand 0']
    %8 = vsyncpa [#allocation5], 0
    %9 = vsyncpa [#allocation6], 0
    %s10 = scalar_lea.sflag [#allocation6], 1
    %11 = vsyncpa %s10, 0
    loop: start=0, step=1, limit=4
    $region2: #{tpu_custom_call.1} parent=1 // loop_pre_header
      _
    $region3: #{tpu_custom_call.1} parent=1 // loop_header
      %s13 = sphi 0, %s17
      %p14 = scmp.ge.s32.totalorder %s13, 4
      %s20 = sphi 0, %s32
      %s21 = sphi 0, %s28
      %s22 = sphi 0, %s20
      %s23 = sphi 0, %s21
      %s24 = sphi 0, %s22
      %s25 = sphi 0, %s23
      %s33 = sphi 0, %s33
      %s35 = sphi 0, %s33
      %s36 = sphi 0, %s35
      %s50 = sphi 0, %s36
      %s54 = sphi 0, %s54
      %s56 = sphi 0, %s54
      %s57 = sphi 0, %s56
      %s71 = sphi 0, %s57
      %s79 = sphi 0, %s81
      %s82 = sphi 0, %s79
      %s83 = sphi 0, %s82
      %s99 = sphi 0, %s83
    $region4: #{tpu_custom_call.1} parent=1 // loop_header_branch
      %16 = sbr.rel (%p14) target = $region8
    $region5: #{tpu_custom_call.1} parent=1 // loop_body
      %s18 = ssub.s32 %s13, 1
      %s19 = ssub.s32 %s13, 2
      %s26 = sadd.s32 1, %s21
      %p27 = scmp.ge.s32.totalorder %s26, 1
      %s28 = scalar_select %p27, 0, %s26
      %s29 = sadd.s32 1, %s20
      %s30 = scalar_select %p27, %s29, %s20
      %p31 = scmp.ge.s32.totalorder %s30, 2
      %s32 = scalar_select %p31, 0, %s30
      %s34 = sadd.s32 %s33, 1
      %p37 = scmp.eq.s32.totalorder %s13, 1
      %p38 = scmp.ne.s32.totalorder %s33, %s35
      %p39 = scmp.eq.s32.totalorder %s13, 0
      %p40 = por %p38, %p39
      %p41 = scmp.ne.s32.totalorder %s33, %s35
      %p42 = scmp.eq.s32.totalorder %s18, 1
      %p43 = por %p41, %p42
      %p44 = scmp.ne.s32.totalorder %s35, %s36
      %p45 = scmp.eq.s32.totalorder %s18, 0
      %p46 = por %p44, %p45
      %p47 = scmp.ne.s32.totalorder %s35, %s36
      %p48 = scmp.eq.s32.totalorder %s19, 1
      %p49 = por %p47, %p48
      %p51 = scmp.ne.s32.totalorder %s36, %s50
      %p52 = scmp.eq.s32.totalorder %s19, 0
      %p53 = por %p51, %p52
      %s55 = sadd.s32 %s54, 1
      %p58 = scmp.eq.s32.totalorder %s13, 1
      %p59 = scmp.ne.s32.totalorder %s54, %s56
      %p60 = scmp.eq.s32.totalorder %s13, 0
      %p61 = por %p59, %p60
      %p62 = scmp.ne.s32.totalorder %s54, %s56
      %p63 = scmp.eq.s32.totalorder %s18, 1
      %p64 = por %p62, %p63
      %p65 = scmp.ne.s32.totalorder %s56, %s57
      %p66 = scmp.eq.s32.totalorder %s18, 0
      %p67 = por %p65, %p66
      %p68 = scmp.ne.s32.totalorder %s56, %s57
      %p69 = scmp.eq.s32.totalorder %s19, 1
      %p70 = por %p68, %p69
      %p72 = scmp.ne.s32.totalorder %s57, %s71
      %p73 = scmp.eq.s32.totalorder %s19, 0
      %p74 = por %p72, %p73
      %s75 = ssub.s32 %s20, %s32
      %s76 = ssub.s32 %s21, %s28
      %s77 = sor.u32 %s75, %s76
      %p78 = scmp.eq.s32.totalorder %s77, 0
      %s80 = sadd.s32 %s79, 1
      %s81 = scalar_select %p78, %s79, %s80
      %p84 = pneg %p78
      %p85 = scmp.eq.s32.totalorder %s13, 1
      %p86 = por %p84, %p85
      %p87 = scmp.ne.s32.totalorder %s79, %s82
      %p88 = scmp.eq.s32.totalorder %s13, 0
      %p89 = por %p87, %p88
      %p90 = scmp.ne.s32.totalorder %s79, %s82
      %p91 = scmp.eq.s32.totalorder %s18, 1
      %p92 = por %p90, %p91
      %p93 = scmp.ne.s32.totalorder %s82, %s83
      %p94 = scmp.eq.s32.totalorder %s18, 0
      %p95 = por %p93, %p94
      %p96 = scmp.ne.s32.totalorder %s82, %s83
      %p97 = scmp.eq.s32.totalorder %s19, 1
      %p98 = por %p96, %p97
      %p100 = scmp.ne.s32.totalorder %s83, %s99
      %p101 = scmp.eq.s32.totalorder %s19, 0
      %p102 = por %p100, %p101
      %p103 = scmp.le.s32.totalorder 1, %s13
      %p104 = scmp.lt.s32.totalorder %s13, 3
      %p105 = pnand %p103, %p104
      %p106 = pneg %p105
      // Predicated region
      $region9: #{tpu_custom_call.1} parent=5 // pred_check
        _
      $region10: #{tpu_custom_call.1} parent=5 // pred_check_branch
        %108 = sbr.rel (%p105) target = $region12
      $region11: #{tpu_custom_call.1} parent=5 // pred_region
        %s109 = ssub.s32 %s13, 1
        // Predicated region
        $region13: #{tpu_custom_call.1} parent=11 // pred_check
          %p110 = pneg %p46
        $region14: #{tpu_custom_call.1} parent=11 // pred_check_branch
          %112 = sbr.rel (%p110) target = $region16
        $region15: #{tpu_custom_call.1} parent=11 // pred_region
          %s114 = ssub.s32 3072, 3072
          %115 = vsyncadd [#allocation5], %s114
          %s116 = sshll.u32 [#allocation4], 4
          %s117 = int_to_ptr.vmem [resolvable:$true] %s116
          %122 = dma.hbm_to_vmem [thread:$0]  %s1, 3072, %s117, [#allocation5], 64, 64, 4
        $region16: #{tpu_custom_call.1} parent=11 // pred_fallthru
          _
        // Predicated region
        $region17: #{tpu_custom_call.1} parent=11 // pred_check
          %p123 = pneg %p67
        $region18: #{tpu_custom_call.1} parent=11 // pred_check_branch
          %125 = sbr.rel (%p123) target = $region20
        $region19: #{tpu_custom_call.1} parent=11 // pred_region
          _
        $region20: #{tpu_custom_call.1} parent=11 // pred_fallthru
          _
      $region12: #{tpu_custom_call.1} parent=5 // pred_fallthru
        _
      %p126 = scmp.lt.s32.totalorder %s13, 2
      // Predicated region
      $region21: #{tpu_custom_call.1} parent=5 // pred_check
        %p127 = pneg %p126
      $region22: #{tpu_custom_call.1} parent=5 // pred_check_branch
        %129 = sbr.rel (%p127) target = $region24
      $region23: #{tpu_custom_call.1} parent=5 // pred_region
        _
      $region24: #{tpu_custom_call.1} parent=5 // pred_fallthru
        _
      %p130 = scmp.le.s32.totalorder 1, %s13
      %p131 = scmp.lt.s32.totalorder %s13, 3
      %p132 = pnand %p130, %p131
      %p133 = pneg %p132
      // Predicated region
      $region25: #{tpu_custom_call.1} parent=5 // pred_check
        _
      $region26: #{tpu_custom_call.1} parent=5 // pred_check_branch
        %135 = sbr.rel (%p132) target = $region28
      $region27: #{tpu_custom_call.1} parent=5 // pred_region
        %s136 = ssub.s32 %s13, 1
        // Predicated region
        $region29: #{tpu_custom_call.1} parent=27 // pred_check
          %p137 = pneg %p46
        $region30: #{tpu_custom_call.1} parent=27 // pred_check_branch
          %139 = sbr.rel (%p137) target = $region32
        $region31: #{tpu_custom_call.1} parent=27 // pred_region
          %140 = dma.done [#allocation5], 3072
        $region32: #{tpu_custom_call.1} parent=27 // pred_fallthru
          _
        %p141 = pneg %p46
        %p142 = pneg %p43
        %p143 = pneg %p67
        %p144 = pneg %p64
        %p145 = pneg %p95
        %p146 = pneg %p92
        %s147 = sand.u32 %s82, 1
        %s148 = scalar_lea.sflag [#allocation6], %s147
        %s149 = sand.u32 %s82, 1
        %s150 = smul.addr %s149, 128
        %s151 = scalar_lea.vmem [#allocation7], %s150
        %s152 = smul.u32 16, %s23
        %p154 = scmp.lt.s32.totalorder %s23, 0
        %s155 = ssub.s32 0, %s23
        %s156 = scalar_select %p154, %s155, %s23
        %s157 = sand.u32 %s156, 1
        %s158 = ssub.s32 0, %s157
        %s159 = scalar_select %p154, %s158, %s157
        %p160 = scmp.ne.s32.totalorder %s159, 0
        %p161 = scmp.lt.s32.totalorder %s159, 0
        %p162 = pnand %p161, %p160
        %p163 = pneg %p162
        %s164 = sadd.s32 %s159, 2
        %s165 = scalar_select %p163, %s164, %s159
        %p166 = scmp.eq.s32.totalorder %s23, 0
        // Predicated region
        $region33: #{tpu_custom_call.1} parent=27 // pred_check
          %p167 = pneg %p166
        $region34: #{tpu_custom_call.1} parent=27 // pred_check_branch
          %169 = sbr.rel (%p167) target = $region36
        $region35: #{tpu_custom_call.1} parent=27 // pred_region
          %s170 = smul.u32 %s22, 36
          %s171 = smul.addr %s170, 64
          %s172 = scalar_lea.hbm %s0, %s171
          %s173 = smul.u32 %s165, 18
          %s174 = smul.addr %s173, 8
          %s175 = scalar_lea.vmem [#allocation2], %s174
          %s176 = scalar_lea.sflag [#allocation3], %s165
          // Predicated region
          $region37: #{tpu_custom_call.1} parent=35 // pred_check
            _
          $region38: #{tpu_custom_call.1} parent=35 // pred_check_branch
            %178 = sbr.rel target = $region40
          $region39: #{tpu_custom_call.1} parent=35 // pred_region
            %179 = sst [smem:[#allocation10]] [#allocation9]
            %180 = sst [smem:[#allocation11]] [#allocation8]
          $region40: #{tpu_custom_call.1} parent=35 // pred_fallthru
            _
          %182 = shalt.err (0)
          %s184 = sshll.u32 %s175, 4
          %s185 = int_to_ptr.vmem [resolvable:$true] %s184
          %187 = dma.hbm_to_vmem [thread:$0]  %s172, 2304, %s185, %s176
        $region36: #{tpu_custom_call.1} parent=27 // pred_fallthru
          _
        %s188 = sadd.s32 %s23, 1
        %p189 = scmp.lt.s32.totalorder %s188, 1
        // Predicated region
        $region41: #{tpu_custom_call.1} parent=27 // pred_check
          %p190 = pneg %p189
        $region42: #{tpu_custom_call.1} parent=27 // pred_check_branch
          %192 = sbr.rel (%p190) target = $region44
        $region43: #{tpu_custom_call.1} parent=27 // pred_region
          %s193 = ssub.s32 1, %s165
          %s194 = smul.u32 %s188, 16
          %s195 = smul.u32 %s194, 2
          %s196 = smul.u32 %s22, 36
          %s197 = sadd.s32 %s195, %s196
          %s198 = smul.addr %s197, 64
          %s199 = scalar_lea.hbm %s0, %s198
          %s200 = smul.u32 %s193, 18
          %s201 = smul.addr %s200, 8
          %s202 = scalar_lea.vmem [#allocation2], %s201
          %s203 = scalar_lea.sflag [#allocation3], %s193
          // Predicated region
          $region45: #{tpu_custom_call.1} parent=43 // pred_check
            _
          $region46: #{tpu_custom_call.1} parent=43 // pred_check_branch
            %205 = sbr.rel target = $region48
          $region47: #{tpu_custom_call.1} parent=43 // pred_region
            %206 = sst [smem:[#allocation10]] [#allocation13]
            %207 = sst [smem:[#allocation11]] [#allocation12]
          $region48: #{tpu_custom_call.1} parent=43 // pred_fallthru
            _
          %209 = shalt.err (0)
          %s211 = sshll.u32 %s202, 4
          %s212 = int_to_ptr.vmem [resolvable:$true] %s211
          %214 = dma.hbm_to_vmem [thread:$0]  %s199, 2304, %s212, %s203
        $region44: #{tpu_custom_call.1} parent=27 // pred_fallthru
          _
        %s215 = smul.u32 %s165, 18
        %s216 = smul.addr %s215, 8
        %s217 = scalar_lea.vmem [#allocation2], %s216
        %s218 = scalar_lea.sflag [#allocation3], %s165
        %s219 = smul.u32 4, 18
        %s220 = smul.u32 %s219, 2
        %s221 = smul.u32 %s220, 1
        %s222 = sshll.u32 %s221, 4
        %223 = dma.done %s218, %s222
        %v224 = vld [vmem:[%s217] sm:$0xff]
        %v225 = vld [vmem:[%s217 + $0x8] sm:$0xff]
        %v226 = vld [vmem:[%s217 + $0x10] sm:$0xff]
        %v227 = vld [vmem:[%s217 + $0x18] sm:$0xff]
        %v228 = vld [vmem:[%s217 + $0x20] sm:$0xff]
        %v229 = vld [vmem:[%s217 + $0x28] sm:$0xff]
        %v230 = vld [vmem:[%s217 + $0x30] sm:$0xff]
        %v231 = vld [vmem:[%s217 + $0x38] sm:$0xff]
        %v232 = vld [vmem:[%s217 + $0x40] sm:$0xff]
        %v233 = vld [vmem:[%s217 + $0x48] sm:$0xff]
        %v234 = vld [vmem:[%s217 + $0x50] sm:$0xff]
        %v235 = vld [vmem:[%s217 + $0x58] sm:$0xff]
        %v236 = vld [vmem:[%s217 + $0x60] sm:$0xff]
        %v237 = vld [vmem:[%s217 + $0x68] sm:$0xff]
        %v238 = vld [vmem:[%s217 + $0x70] sm:$0xff]
        %v239 = vld [vmem:[%s217 + $0x78] sm:$0xff]
        %v240 = vld [vmem:[#allocation4] sm:$0xf]
        %v241 = vld [vmem:[#allocation4 + $0x4] sm:$0xf]
        %v242 = vld [vmem:[#allocation4 + $0x8] sm:$0xf]
        %v243 = vld [vmem:[#allocation4 + $0xc] sm:$0xf]
        %v244 = vld [vmem:[#allocation4 + $0x10] sm:$0xf]
        %v245 = vld [vmem:[#allocation4 + $0x14] sm:$0xf]
        %v246 = vld [vmem:[#allocation4 + $0x18] sm:$0xf]
        %v247 = vld [vmem:[#allocation4 + $0x1c] sm:$0xf]
        %v248 = vld [vmem:[#allocation4 + $0x20] sm:$0xf]
        %v249 = vld [vmem:[#allocation4 + $0x24] sm:$0xf]
        %v250 = vld [vmem:[#allocation4 + $0x28] sm:$0xf]
        %v251 = vld [vmem:[#allocation4 + $0x2c] sm:$0xf]
        %v252 = vld [vmem:[#allocation4 + $0x30] sm:$0xf]
        %v253 = vld [vmem:[#allocation4 + $0x34] sm:$0xf]
        %v254 = vld [vmem:[#allocation4 + $0x38] sm:$0xf]
        %v255 = vld [vmem:[#allocation4 + $0x3c] sm:$0xf]
        %s256 = scalar_lea.vmem %s217, 8 [#allocation2]
        %v257 = vld [vmem:[%s256] sm:$0xff]
        %v258 = vld [vmem:[%s256 + $0x8] sm:$0xff]
        %v259 = vld [vmem:[%s256 + $0x10] sm:$0xff]
        %v260 = vld [vmem:[%s256 + $0x18] sm:$0xff]
        %v261 = vld [vmem:[%s256 + $0x20] sm:$0xff]
        %v262 = vld [vmem:[%s256 + $0x28] sm:$0xff]
        %v263 = vld [vmem:[%s256 + $0x30] sm:$0xff]
        %v264 = vld [vmem:[%s256 + $0x38] sm:$0xff]
        %v265 = vld [vmem:[%s256 + $0x40] sm:$0xff]
        %v266 = vld [vmem:[%s256 + $0x48] sm:$0xff]
        %v267 = vld [vmem:[%s256 + $0x50] sm:$0xff]
        %v268 = vld [vmem:[%s256 + $0x58] sm:$0xff]
        %v269 = vld [vmem:[%s256 + $0x60] sm:$0xff]
        %v270 = vld [vmem:[%s256 + $0x68] sm:$0xff]
        %v271 = vld [vmem:[%s256 + $0x70] sm:$0xff]
        %v272 = vld [vmem:[%s256 + $0x78] sm:$0xff]
        %s273 = scalar_lea.vmem [#allocation4], 64
        %v274 = vld [vmem:[%s273] sm:$0xf]
        %v275 = vld [vmem:[%s273 + $0x4] sm:$0xf]
        %v276 = vld [vmem:[%s273 + $0x8] sm:$0xf]
        %v277 = vld [vmem:[%s273 + $0xc] sm:$0xf]
        %v278 = vld [vmem:[%s273 + $0x10] sm:$0xf]
        %v279 = vld [vmem:[%s273 + $0x14] sm:$0xf]
        %v280 = vld [vmem:[%s273 + $0x18] sm:$0xf]
        %v281 = vld [vmem:[%s273 + $0x1c] sm:$0xf]
        %v282 = vld [vmem:[%s273 + $0x20] sm:$0xf]
        %v283 = vld [vmem:[%s273 + $0x24] sm:$0xf]
        %v284 = vld [vmem:[%s273 + $0x28] sm:$0xf]
        %v285 = vld [vmem:[%s273 + $0x2c] sm:$0xf]
        %v286 = vld [vmem:[%s273 + $0x30] sm:$0xf]
        %v287 = vld [vmem:[%s273 + $0x34] sm:$0xf]
        %v288 = vld [vmem:[%s273 + $0x38] sm:$0xf]
        %v289 = vld [vmem:[%s273 + $0x3c] sm:$0xf]
        %v306 = vunpack.c.l.b16 %v274
        %v307 = vunpack.c.l.b16 %v275
        %v308 = vunpack.c.l.b16 %v276
        %v309 = vunpack.c.l.b16 %v277
        %v310 = vunpack.c.l.b16 %v278
        %v311 = vunpack.c.l.b16 %v279
        %v312 = vunpack.c.l.b16 %v280
        %v313 = vunpack.c.l.b16 %v281
        %v314 = vunpack.c.l.b16 %v282
        %v315 = vunpack.c.l.b16 %v283
        %v316 = vunpack.c.l.b16 %v284
        %v317 = vunpack.c.l.b16 %v285
        %v318 = vunpack.c.l.b16 %v286
        %v319 = vunpack.c.l.b16 %v287
        %v320 = vunpack.c.l.b16 %v288
        %v321 = vunpack.c.l.b16 %v289
        %v322 = vpack.c.b16 %v307, %v306
        %v323 = vpack.c.b16 %v309, %v308
        %v324 = vpack.c.b16 %v311, %v310
        %v325 = vpack.c.b16 %v313, %v312
        %v326 = vpack.c.b16 %v315, %v314
        %v327 = vpack.c.b16 %v317, %v316
        %v328 = vpack.c.b16 %v319, %v318
        %v329 = vpack.c.b16 %v321, %v320
        %338 = vmatprep.subr.bf16.mxu0 0
        %339 = vmatpush1.bf16.msra.mxu0 %v322
        %340 = vmatprep.subr.bf16.mxu0 0
        %341 = vmatpush1.bf16.msra.mxu0 %v323
        %342 = vmatprep.subr.bf16.mxu0 0
        %343 = vmatpush1.bf16.msra.mxu0 %v324
        %344 = vmatprep.subr.bf16.mxu0 0
        %345 = vmatpush1.bf16.msra.mxu0 %v325
        %346 = vmatprep.subr.bf16.mxu0 0
        %347 = vmatpush1.bf16.msra.mxu0 %v326
        %348 = vmatprep.subr.bf16.mxu0 0
        %349 = vmatpush1.bf16.msra.mxu0 %v327
        %350 = vmatprep.subr.bf16.mxu0 0
        %351 = vmatpush1.bf16.msra.mxu0 %v328
        %352 = vmatprep.subr.bf16.mxu0 0
        %353 = vmatpush1.bf16.msra.mxu0 %v329
        %354 = vmatprep.subr.bf16.mxu0 0
        %355 = vmatpush1.bf16.msra.mxu0 0
        %356 = vmatprep.subr.bf16.mxu0 0
        %357 = vmatpush1.bf16.msra.mxu0 0
        %358 = vmatprep.subr.bf16.mxu0 0
        %359 = vmatpush1.bf16.msra.mxu0 0
        %360 = vmatprep.subr.bf16.mxu0 0
        %361 = vmatpush1.bf16.msra.mxu0 0
        %362 = vmatprep.subr.bf16.mxu0 0
        %363 = vmatpush1.bf16.msra.mxu0 0
        %364 = vmatprep.subr.bf16.mxu0 0
        %365 = vmatpush1.bf16.msra.mxu0 0
        %366 = vmatprep.subr.bf16.mxu0 0
        %367 = vmatpush1.bf16.msra.mxu0 0
        %368 = vmatprep.subr.bf16.mxu0 0
        %369 = vmatpush1.bf16.msra.mxu0 0
        %370 = vmatprep.mubr.bf16.mxu0 0
        %371 = vmatmul.mubr.bf16.gmra.mrb[0].mxu0 %v257
        %v372 = vpop.f32.mrb[0].mxu0
        %v373 = vadd.f32 0.0, %v372
        %v374 = vpop.f32.mrb[0].mxu0
        %v375 = vpop.f32.mrb[0].mxu0
        %v376 = vadd.f32 0.0, %v375
        %v377 = vpop.f32.mrb[0].mxu0
        %378 = vmatprep.mubr.bf16.mxu0 0
        %379 = vmatmul.mubr.bf16.gmra.mrb[0].mxu0 %v258
        %v380 = vpop.f32.mrb[0].mxu0
        %v381 = vadd.f32 0.0, %v380
        %v382 = vpop.f32.mrb[0].mxu0
        %v383 = vpop.f32.mrb[0].mxu0
        %v384 = vadd.f32 0.0, %v383
        %v385 = vpop.f32.mrb[0].mxu0
        %386 = vmatprep.mubr.bf16.mxu0 0
        %387 = vmatmul.mubr.bf16.gmra.mrb[0].mxu0 %v259
        %v388 = vpop.f32.mrb[0].mxu0
        %v389 = vadd.f32 0.0, %v388
        %v390 = vpop.f32.mrb[0].mxu0
        %v391 = vpop.f32.mrb[0].mxu0
        %v392 = vadd.f32 0.0, %v391
        %v393 = vpop.f32.mrb[0].mxu0
        %394 = vmatprep.mubr.bf16.mxu0 0
        %395 = vmatmul.mubr.bf16.gmra.mrb[0].mxu0 %v260
        %v396 = vpop.f32.mrb[0].mxu0
        %v397 = vadd.f32 0.0, %v396
        %v398 = vpop.f32.mrb[0].mxu0
        %v399 = vpop.f32.mrb[0].mxu0
        %v400 = vadd.f32 0.0, %v399
        %v401 = vpop.f32.mrb[0].mxu0
        %402 = vmatprep.mubr.bf16.mxu0 0
        %403 = vmatmul.mubr.bf16.gmra.mrb[0].mxu0 %v261
        %v404 = vpop.f32.mrb[0].mxu0
        %v405 = vadd.f32 0.0, %v404
        %v406 = vpop.f32.mrb[0].mxu0
        %v407 = vpop.f32.mrb[0].mxu0
        %v408 = vadd.f32 0.0, %v407
        %v409 = vpop.f32.mrb[0].mxu0
        %410 = vmatprep.mubr.bf16.mxu0 0
        %411 = vmatmul.mubr.bf16.gmra.mrb[0].mxu0 %v262
        %v412 = vpop.f32.mrb[0].mxu0
        %v413 = vadd.f32 0.0, %v412
        %v414 = vpop.f32.mrb[0].mxu0
        %v415 = vpop.f32.mrb[0].mxu0
        %v416 = vadd.f32 0.0, %v415
        %v417 = vpop.f32.mrb[0].mxu0
        %418 = vmatprep.mubr.bf16.mxu0 0
        %419 = vmatmul.mubr.bf16.gmra.mrb[0].mxu0 %v263
        %v420 = vpop.f32.mrb[0].mxu0
        %v421 = vadd.f32 0.0, %v420
        %v422 = vpop.f32.mrb[0].mxu0
        %v423 = vpop.f32.mrb[0].mxu0
        %v424 = vadd.f32 0.0, %v423
        %v425 = vpop.f32.mrb[0].mxu0
        %426 = vmatprep.mubr.bf16.mxu0 0
        %427 = vmatmul.mubr.bf16.gmra.mrb[0].mxu0 %v264
        %v428 = vpop.f32.mrb[0].mxu0
        %v429 = vadd.f32 0.0, %v428
        %v430 = vpop.f32.mrb[0].mxu0
        %v431 = vpop.f32.mrb[0].mxu0
        %v432 = vadd.f32 0.0, %v431
        %v433 = vpop.f32.mrb[0].mxu0
        %434 = vmatprep.mubr.bf16.mxu0 0
        %435 = vmatmul.mubr.bf16.gmra.mrb[0].mxu0 %v265
        %v436 = vpop.f32.mrb[0].mxu0
        %v437 = vadd.f32 0.0, %v436
        %v438 = vpop.f32.mrb[0].mxu0
        %v439 = vpop.f32.mrb[0].mxu0
        %v440 = vadd.f32 0.0, %v439
        %v441 = vpop.f32.mrb[0].mxu0
        %442 = vmatprep.mubr.bf16.mxu0 0
        %443 = vmatmul.mubr.bf16.gmra.mrb[0].mxu0 %v266
        %v444 = vpop.f32.mrb[0].mxu0
        %v445 = vadd.f32 0.0, %v444
        %v446 = vpop.f32.mrb[0].mxu0
        %v447 = vpop.f32.mrb[0].mxu0
        %v448 = vadd.f32 0.0, %v447
        %v449 = vpop.f32.mrb[0].mxu0
        %450 = vmatprep.mubr.bf16.mxu0 0
        %451 = vmatmul.mubr.bf16.gmra.mrb[0].mxu0 %v267
        %v452 = vpop.f32.mrb[0].mxu0
        %v453 = vadd.f32 0.0, %v452
        %v454 = vpop.f32.mrb[0].mxu0
        %v455 = vpop.f32.mrb[0].mxu0
        %v456 = vadd.f32 0.0, %v455
        %v457 = vpop.f32.mrb[0].mxu0
        %458 = vmatprep.mubr.bf16.mxu0 0
        %459 = vmatmul.mubr.bf16.gmra.mrb[0].mxu0 %v268
        %v460 = vpop.f32.mrb[0].mxu0
        %v461 = vadd.f32 0.0, %v460
        %v462 = vpop.f32.mrb[0].mxu0
        %v463 = vpop.f32.mrb[0].mxu0
        %v464 = vadd.f32 0.0, %v463
        %v465 = vpop.f32.mrb[0].mxu0
        %466 = vmatprep.mubr.bf16.mxu0 0
        %467 = vmatmul.mubr.bf16.gmra.mrb[0].mxu0 %v269
        %v468 = vpop.f32.mrb[0].mxu0
        %v469 = vadd.f32 0.0, %v468
        %v470 = vpop.f32.mrb[0].mxu0
        %v471 = vpop.f32.mrb[0].mxu0
        %v472 = vadd.f32 0.0, %v471
        %v473 = vpop.f32.mrb[0].mxu0
        %474 = vmatprep.mubr.bf16.mxu0 0
        %475 = vmatmul.mubr.bf16.gmra.mrb[0].mxu0 %v270
        %v476 = vpop.f32.mrb[0].mxu0
        %v477 = vadd.f32 0.0, %v476
        %v478 = vpop.f32.mrb[0].mxu0
        %v479 = vpop.f32.mrb[0].mxu0
        %v480 = vadd.f32 0.0, %v479
        %v481 = vpop.f32.mrb[0].mxu0
        %482 = vmatprep.mubr.bf16.mxu0 0
        %483 = vmatmul.mubr.bf16.gmra.mrb[0].mxu0 %v271
        %v484 = vpop.f32.mrb[0].mxu0
        %v485 = vadd.f32 0.0, %v484
        %v486 = vpop.f32.mrb[0].mxu0
        %v487 = vpop.f32.mrb[0].mxu0
        %v488 = vadd.f32 0.0, %v487
        %v489 = vpop.f32.mrb[0].mxu0
        %490 = vmatprep.mubr.bf16.mxu0 0
        %491 = vmatmul.mubr.bf16.gmra.mrb[0].mxu0 %v272
        %v492 = vpop.f32.mrb[0].mxu0
        %v493 = vadd.f32 0.0, %v492
        %v494 = vpop.f32.mrb[0].mxu0
        %v495 = vpop.f32.mrb[0].mxu0
        %v496 = vadd.f32 0.0, %v495
        %v497 = vpop.f32.mrb[0].mxu0
        %498 = vdwg.mxu0
        %v515 = vunpack.c.l.b16 %v240
        %v516 = vunpack.c.l.b16 %v241
        %v517 = vunpack.c.l.b16 %v242
        %v518 = vunpack.c.l.b16 %v243
        %v519 = vunpack.c.l.b16 %v244
        %v520 = vunpack.c.l.b16 %v245
        %v521 = vunpack.c.l.b16 %v246
        %v522 = vunpack.c.l.b16 %v247
        %v523 = vunpack.c.l.b16 %v248
        %v524 = vunpack.c.l.b16 %v249
        %v525 = vunpack.c.l.b16 %v250
        %v526 = vunpack.c.l.b16 %v251
        %v527 = vunpack.c.l.b16 %v252
        %v528 = vunpack.c.l.b16 %v253
        %v529 = vunpack.c.l.b16 %v254
        %v530 = vunpack.c.l.b16 %v255
        %v531 = vpack.c.b16 %v516, %v515
        %v532 = vpack.c.b16 %v518, %v517
        %v533 = vpack.c.b16 %v520, %v519
        %v534 = vpack.c.b16 %v522, %v521
        %v535 = vpack.c.b16 %v524, %v523
        %v536 = vpack.c.b16 %v526, %v525
        %v537 = vpack.c.b16 %v528, %v527
        %v538 = vpack.c.b16 %v530, %v529
        %547 = vmatprep.subr.bf16.mxu0 0
        %548 = vmatpush1.bf16.msra.mxu0 %v531
        %549 = vmatprep.subr.bf16.mxu0 0
        %550 = vmatpush1.bf16.msra.mxu0 %v532
        %551 = vmatprep.subr.bf16.mxu0 0
        %552 = vmatpush1.bf16.msra.mxu0 %v533
        %553 = vmatprep.subr.bf16.mxu0 0
        %554 = vmatpush1.bf16.msra.mxu0 %v534
        %555 = vmatprep.subr.bf16.mxu0 0
        %556 = vmatpush1.bf16.msra.mxu0 %v535
        %557 = vmatprep.subr.bf16.mxu0 0
        %558 = vmatpush1.bf16.msra.mxu0 %v536
        %559 = vmatprep.subr.bf16.mxu0 0
        %560 = vmatpush1.bf16.msra.mxu0 %v537
        %561 = vmatprep.subr.bf16.mxu0 0
        %562 = vmatpush1.bf16.msra.mxu0 %v538
        %563 = vmatprep.subr.bf16.mxu0 0
        %564 = vmatpush1.bf16.msra.mxu0 0
        %565 = vmatprep.subr.bf16.mxu0 0
        %566 = vmatpush1.bf16.msra.mxu0 0
        %567 = vmatprep.subr.bf16.mxu0 0
        %568 = vmatpush1.bf16.msra.mxu0 0
        %569 = vmatprep.subr.bf16.mxu0 0
        %570 = vmatpush1.bf16.msra.mxu0 0
        %571 = vmatprep.subr.bf16.mxu0 0
        %572 = vmatpush1.bf16.msra.mxu0 0
        %573 = vmatprep.subr.bf16.mxu0 0
        %574 = vmatpush1.bf16.msra.mxu0 0
        %575 = vmatprep.subr.bf16.mxu0 0
        %576 = vmatpush1.bf16.msra.mxu0 0
        %577 = vmatprep.subr.bf16.mxu0 0
        %578 = vmatpush1.bf16.msra.mxu0 0
        %579 = vmatprep.mubr.bf16.mxu0 0
        %580 = vmatmul.mubr.bf16.gmra.mrb[0].mxu0 %v224
        %v581 = vpop.f32.mrb[0].mxu0
        %v582 = vadd.f32 %v373, %v581
        %v583 = vpop.f32.mrb[0].mxu0
        %v584 = vpop.f32.mrb[0].mxu0
        %v585 = vadd.f32 %v376, %v584
        %v586 = vpop.f32.mrb[0].mxu0
        %587 = vmatprep.mubr.bf16.mxu0 0
        %588 = vmatmul.mubr.bf16.gmra.mrb[0].mxu0 %v225
        %v589 = vpop.f32.mrb[0].mxu0
        %v590 = vadd.f32 %v381, %v589
        %v591 = vpop.f32.mrb[0].mxu0
        %v592 = vpop.f32.mrb[0].mxu0
        %v593 = vadd.f32 %v384, %v592
        %v594 = vpop.f32.mrb[0].mxu0
        %595 = vmatprep.mubr.bf16.mxu0 0
        %596 = vmatmul.mubr.bf16.gmra.mrb[0].mxu0 %v226
        %v597 = vpop.f32.mrb[0].mxu0
        %v598 = vadd.f32 %v389, %v597
        %v599 = vpop.f32.mrb[0].mxu0
        %v600 = vpop.f32.mrb[0].mxu0
        %v601 = vadd.f32 %v392, %v600
        %v602 = vpop.f32.mrb[0].mxu0
        %603 = vmatprep.mubr.bf16.mxu0 0
        %604 = vmatmul.mubr.bf16.gmra.mrb[0].mxu0 %v227
        %v605 = vpop.f32.mrb[0].mxu0
        %v606 = vadd.f32 %v397, %v605
        %v607 = vpop.f32.mrb[0].mxu0
        %v608 = vpop.f32.mrb[0].mxu0
        %v609 = vadd.f32 %v400, %v608
        %v610 = vpop.f32.mrb[0].mxu0
        %611 = vmatprep.mubr.bf16.mxu0 0
        %612 = vmatmul.mubr.bf16.gmra.mrb[0].mxu0 %v228
        %v613 = vpop.f32.mrb[0].mxu0
        %v614 = vadd.f32 %v405, %v613
        %v615 = vpop.f32.mrb[0].mxu0
        %v616 = vpop.f32.mrb[0].mxu0
        %v617 = vadd.f32 %v408, %v616
        %v618 = vpop.f32.mrb[0].mxu0
        %619 = vmatprep.mubr.bf16.mxu0 0
        %620 = vmatmul.mubr.bf16.gmra.mrb[0].mxu0 %v229
        %v621 = vpop.f32.mrb[0].mxu0
        %v622 = vadd.f32 %v413, %v621
        %v623 = vpop.f32.mrb[0].mxu0
        %v624 = vpop.f32.mrb[0].mxu0
        %v625 = vadd.f32 %v416, %v624
        %v626 = vpop.f32.mrb[0].mxu0
        %627 = vmatprep.mubr.bf16.mxu0 0
        %628 = vmatmul.mubr.bf16.gmra.mrb[0].mxu0 %v230
        %v629 = vpop.f32.mrb[0].mxu0
        %v630 = vadd.f32 %v421, %v629
        %v631 = vpop.f32.mrb[0].mxu0
        %v632 = vpop.f32.mrb[0].mxu0
        %v633 = vadd.f32 %v424, %v632
        %v634 = vpop.f32.mrb[0].mxu0
        %635 = vmatprep.mubr.bf16.mxu0 0
        %636 = vmatmul.mubr.bf16.gmra.mrb[0].mxu0 %v231
        %v637 = vpop.f32.mrb[0].mxu0
        %v638 = vadd.f32 %v429, %v637
        %v639 = vpop.f32.mrb[0].mxu0
        %v640 = vpop.f32.mrb[0].mxu0
        %v641 = vadd.f32 %v432, %v640
        %v642 = vpop.f32.mrb[0].mxu0
        %643 = vmatprep.mubr.bf16.mxu0 0
        %644 = vmatmul.mubr.bf16.gmra.mrb[0].mxu0 %v232
        %v645 = vpop.f32.mrb[0].mxu0
        %v646 = vadd.f32 %v437, %v645
        %v647 = vpop.f32.mrb[0].mxu0
        %v648 = vpop.f32.mrb[0].mxu0
        %v649 = vadd.f32 %v440, %v648
        %v650 = vpop.f32.mrb[0].mxu0
        %651 = vmatprep.mubr.bf16.mxu0 0
        %652 = vmatmul.mubr.bf16.gmra.mrb[0].mxu0 %v233
        %v653 = vpop.f32.mrb[0].mxu0
        %v654 = vadd.f32 %v445, %v653
        %v655 = vpop.f32.mrb[0].mxu0
        %v656 = vpop.f32.mrb[0].mxu0
        %v657 = vadd.f32 %v448, %v656
        %v658 = vpop.f32.mrb[0].mxu0
        %659 = vmatprep.mubr.bf16.mxu0 0
        %660 = vmatmul.mubr.bf16.gmra.mrb[0].mxu0 %v234
        %v661 = vpop.f32.mrb[0].mxu0
        %v662 = vadd.f32 %v453, %v661
        %v663 = vpop.f32.mrb[0].mxu0
        %v664 = vpop.f32.mrb[0].mxu0
        %v665 = vadd.f32 %v456, %v664
        %v666 = vpop.f32.mrb[0].mxu0
        %667 = vmatprep.mubr.bf16.mxu0 0
        %668 = vmatmul.mubr.bf16.gmra.mrb[0].mxu0 %v235
        %v669 = vpop.f32.mrb[0].mxu0
        %v670 = vadd.f32 %v461, %v669
        %v671 = vpop.f32.mrb[0].mxu0
        %v672 = vpop.f32.mrb[0].mxu0
        %v673 = vadd.f32 %v464, %v672
        %v674 = vpop.f32.mrb[0].mxu0
        %675 = vmatprep.mubr.bf16.mxu0 0
        %676 = vmatmul.mubr.bf16.gmra.mrb[0].mxu0 %v236
        %v677 = vpop.f32.mrb[0].mxu0
        %v678 = vadd.f32 %v469, %v677
        %v679 = vpop.f32.mrb[0].mxu0
        %v680 = vpop.f32.mrb[0].mxu0
        %v681 = vadd.f32 %v472, %v680
        %v682 = vpop.f32.mrb[0].mxu0
        %683 = vmatprep.mubr.bf16.mxu0 0
        %684 = vmatmul.mubr.bf16.gmra.mrb[0].mxu0 %v237
        %v685 = vpop.f32.mrb[0].mxu0
        %v686 = vadd.f32 %v477, %v685
        %v687 = vpop.f32.mrb[0].mxu0
        %v688 = vpop.f32.mrb[0].mxu0
        %v689 = vadd.f32 %v480, %v688
        %v690 = vpop.f32.mrb[0].mxu0
        %691 = vmatprep.mubr.bf16.mxu0 0
        %692 = vmatmul.mubr.bf16.gmra.mrb[0].mxu0 %v238
        %v693 = vpop.f32.mrb[0].mxu0
        %v694 = vadd.f32 %v485, %v693
        %v695 = vpop.f32.mrb[0].mxu0
        %v696 = vpop.f32.mrb[0].mxu0
        %v697 = vadd.f32 %v488, %v696
        %v698 = vpop.f32.mrb[0].mxu0
        %699 = vmatprep.mubr.bf16.mxu0 0
        %700 = vmatmul.mubr.bf16.gmra.mrb[0].mxu0 %v239
        %v701 = vpop.f32.mrb[0].mxu0
        %v702 = vadd.f32 %v493, %v701
        %v703 = vpop.f32.mrb[0].mxu0
        %v704 = vpop.f32.mrb[0].mxu0
        %v705 = vadd.f32 %v496, %v704
        %v706 = vpop.f32.mrb[0].mxu0
        %707 = vdwg.mxu0
        %s708 = scalar_lea.vmem %s217, 16 [#allocation2]
        %v709 = vld [vmem:[%s708] sm:$0xff]
        %v710 = vld [vmem:[%s708 + $0x8] sm:$0xff]
        %v711 = vld [vmem:[%s708 + $0x10] sm:$0xff]
        %v712 = vld [vmem:[%s708 + $0x18] sm:$0xff]
        %v713 = vld [vmem:[%s708 + $0x20] sm:$0xff]
        %v714 = vld [vmem:[%s708 + $0x28] sm:$0xff]
        %v715 = vld [vmem:[%s708 + $0x30] sm:$0xff]
        %v716 = vld [vmem:[%s708 + $0x38] sm:$0xff]
        %v717 = vld [vmem:[%s708 + $0x40] sm:$0xff]
        %v718 = vld [vmem:[%s708 + $0x48] sm:$0xff]
        %v719 = vld [vmem:[%s708 + $0x50] sm:$0xff]
        %v720 = vld [vmem:[%s708 + $0x58] sm:$0xff]
        %v721 = vld [vmem:[%s708 + $0x60] sm:$0xff]
        %v722 = vld [vmem:[%s708 + $0x68] sm:$0xff]
        %v723 = vld [vmem:[%s708 + $0x70] sm:$0xff]
        %v724 = vld [vmem:[%s708 + $0x78] sm:$0xff]
        %s725 = scalar_lea.vmem [#allocation4], 128
        %v726 = vld [vmem:[%s725] sm:$0xf]
        %v727 = vld [vmem:[%s725 + $0x4] sm:$0xf]
        %v728 = vld [vmem:[%s725 + $0x8] sm:$0xf]
        %v729 = vld [vmem:[%s725 + $0xc] sm:$0xf]
        %v730 = vld [vmem:[%s725 + $0x10] sm:$0xf]
        %v731 = vld [vmem:[%s725 + $0x14] sm:$0xf]
        %v732 = vld [vmem:[%s725 + $0x18] sm:$0xf]
        %v733 = vld [vmem:[%s725 + $0x1c] sm:$0xf]
        %v734 = vld [vmem:[%s725 + $0x20] sm:$0xf]
        %v735 = vld [vmem:[%s725 + $0x24] sm:$0xf]
        %v736 = vld [vmem:[%s725 + $0x28] sm:$0xf]
        %v737 = vld [vmem:[%s725 + $0x2c] sm:$0xf]
        %v738 = vld [vmem:[%s725 + $0x30] sm:$0xf]
        %v739 = vld [vmem:[%s725 + $0x34] sm:$0xf]
        %v740 = vld [vmem:[%s725 + $0x38] sm:$0xf]
        %v741 = vld [vmem:[%s725 + $0x3c] sm:$0xf]
        %v758 = vunpack.c.l.b16 %v726
        %v759 = vunpack.c.l.b16 %v727
        %v760 = vunpack.c.l.b16 %v728
        %v761 = vunpack.c.l.b16 %v729
        %v762 = vunpack.c.l.b16 %v730
        %v763 = vunpack.c.l.b16 %v731
        %v764 = vunpack.c.l.b16 %v732
        %v765 = vunpack.c.l.b16 %v733
        %v766 = vunpack.c.l.b16 %v734
        %v767 = vunpack.c.l.b16 %v735
        %v768 = vunpack.c.l.b16 %v736
        %v769 = vunpack.c.l.b16 %v737
        %v770 = vunpack.c.l.b16 %v738
        %v771 = vunpack.c.l.b16 %v739
        %v772 = vunpack.c.l.b16 %v740
        %v773 = vunpack.c.l.b16 %v741
        %v774 = vpack.c.b16 %v759, %v758
        %v775 = vpack.c.b16 %v761, %v760
        %v776 = vpack.c.b16 %v763, %v762
        %v777 = vpack.c.b16 %v765, %v764
        %v778 = vpack.c.b16 %v767, %v766
        %v779 = vpack.c.b16 %v769, %v768
        %v780 = vpack.c.b16 %v771, %v770
        %v781 = vpack.c.b16 %v773, %v772
        %790 = vmatprep.subr.bf16.mxu0 0
        %791 = vmatpush1.bf16.msra.mxu0 %v774
        %792 = vmatprep.subr.bf16.mxu0 0
        %793 = vmatpush1.bf16.msra.mxu0 %v775
        %794 = vmatprep.subr.bf16.mxu0 0
        %795 = vmatpush1.bf16.msra.mxu0 %v776
        %796 = vmatprep.subr.bf16.mxu0 0
        %797 = vmatpush1.bf16.msra.mxu0 %v777
        %798 = vmatprep.subr.bf16.mxu0 0
        %799 = vmatpush1.bf16.msra.mxu0 %v778
        %800 = vmatprep.subr.bf16.mxu0 0
        %801 = vmatpush1.bf16.msra.mxu0 %v779
        %802 = vmatprep.subr.bf16.mxu0 0
        %803 = vmatpush1.bf16.msra.mxu0 %v780
        %804 = vmatprep.subr.bf16.mxu0 0
        %805 = vmatpush1.bf16.msra.mxu0 %v781
        %806 = vmatprep.subr.bf16.mxu0 0
        %807 = vmatpush1.bf16.msra.mxu0 0
        %808 = vmatprep.subr.bf16.mxu0 0
        %809 = vmatpush1.bf16.msra.mxu0 0
        %810 = vmatprep.subr.bf16.mxu0 0
        %811 = vmatpush1.bf16.msra.mxu0 0
        %812 = vmatprep.subr.bf16.mxu0 0
        %813 = vmatpush1.bf16.msra.mxu0 0
        %814 = vmatprep.subr.bf16.mxu0 0
        %815 = vmatpush1.bf16.msra.mxu0 0
        %816 = vmatprep.subr.bf16.mxu0 0
        %817 = vmatpush1.bf16.msra.mxu0 0
        %818 = vmatprep.subr.bf16.mxu0 0
        %819 = vmatpush1.bf16.msra.mxu0 0
        %820 = vmatprep.subr.bf16.mxu0 0
        %821 = vmatpush1.bf16.msra.mxu0 0
        %822 = vmatprep.mubr.bf16.mxu0 0
        %823 = vmatmul.mubr.bf16.gmra.mrb[0].mxu0 %v709
        %v824 = vpop.f32.mrb[0].mxu0
        %v825 = vadd.f32 0.0, %v824
        %v826 = vpop.f32.mrb[0].mxu0
        %v827 = vpop.f32.mrb[0].mxu0
        %v828 = vadd.f32 0.0, %v827
        %v829 = vpop.f32.mrb[0].mxu0
        %830 = vmatprep.mubr.bf16.mxu0 0
        %831 = vmatmul.mubr.bf16.gmra.mrb[0].mxu0 %v710
        %v832 = vpop.f32.mrb[0].mxu0
        %v833 = vadd.f32 0.0, %v832
        %v834 = vpop.f32.mrb[0].mxu0
        %v835 = vpop.f32.mrb[0].mxu0
        %v836 = vadd.f32 0.0, %v835
        %v837 = vpop.f32.mrb[0].mxu0
        %838 = vmatprep.mubr.bf16.mxu0 0
        %839 = vmatmul.mubr.bf16.gmra.mrb[0].mxu0 %v711
        %v840 = vpop.f32.mrb[0].mxu0
        %v841 = vadd.f32 0.0, %v840
        %v842 = vpop.f32.mrb[0].mxu0
        %v843 = vpop.f32.mrb[0].mxu0
        %v844 = vadd.f32 0.0, %v843
        %v845 = vpop.f32.mrb[0].mxu0
        %846 = vmatprep.mubr.bf16.mxu0 0
        %847 = vmatmul.mubr.bf16.gmra.mrb[0].mxu0 %v712
        %v848 = vpop.f32.mrb[0].mxu0
        %v849 = vadd.f32 0.0, %v848
        %v850 = vpop.f32.mrb[0].mxu0
        %v851 = vpop.f32.mrb[0].mxu0
        %v852 = vadd.f32 0.0, %v851
        %v853 = vpop.f32.mrb[0].mxu0
        %854 = vmatprep.mubr.bf16.mxu0 0
        %855 = vmatmul.mubr.bf16.gmra.mrb[0].mxu0 %v713
        %v856 = vpop.f32.mrb[0].mxu0
        %v857 = vadd.f32 0.0, %v856
        %v858 = vpop.f32.mrb[0].mxu0
        %v859 = vpop.f32.mrb[0].mxu0
        %v860 = vadd.f32 0.0, %v859
        %v861 = vpop.f32.mrb[0].mxu0
        %862 = vmatprep.mubr.bf16.mxu0 0
        %863 = vmatmul.mubr.bf16.gmra.mrb[0].mxu0 %v714
        %v864 = vpop.f32.mrb[0].mxu0
        %v865 = vadd.f32 0.0, %v864
        %v866 = vpop.f32.mrb[0].mxu0
        %v867 = vpop.f32.mrb[0].mxu0
        %v868 = vadd.f32 0.0, %v867
        %v869 = vpop.f32.mrb[0].mxu0
        %870 = vmatprep.mubr.bf16.mxu0 0
        %871 = vmatmul.mubr.bf16.gmra.mrb[0].mxu0 %v715
        %v872 = vpop.f32.mrb[0].mxu0
        %v873 = vadd.f32 0.0, %v872
        %v874 = vpop.f32.mrb[0].mxu0
        %v875 = vpop.f32.mrb[0].mxu0
        %v876 = vadd.f32 0.0, %v875
        %v877 = vpop.f32.mrb[0].mxu0
        %878 = vmatprep.mubr.bf16.mxu0 0
        %879 = vmatmul.mubr.bf16.gmra.mrb[0].mxu0 %v716
        %v880 = vpop.f32.mrb[0].mxu0
        %v881 = vadd.f32 0.0, %v880
        %v882 = vpop.f32.mrb[0].mxu0
        %v883 = vpop.f32.mrb[0].mxu0
        %v884 = vadd.f32 0.0, %v883
        %v885 = vpop.f32.mrb[0].mxu0
        %886 = vmatprep.mubr.bf16.mxu0 0
        %887 = vmatmul.mubr.bf16.gmra.mrb[0].mxu0 %v717
        %v888 = vpop.f32.mrb[0].mxu0
        %v889 = vadd.f32 0.0, %v888
        %v890 = vpop.f32.mrb[0].mxu0
        %v891 = vpop.f32.mrb[0].mxu0
        %v892 = vadd.f32 0.0, %v891
        %v893 = vpop.f32.mrb[0].mxu0
        %894 = vmatprep.mubr.bf16.mxu0 0
        %895 = vmatmul.mubr.bf16.gmra.mrb[0].mxu0 %v718
        %v896 = vpop.f32.mrb[0].mxu0
        %v897 = vadd.f32 0.0, %v896
        %v898 = vpop.f32.mrb[0].mxu0
        %v899 = vpop.f32.mrb[0].mxu0
        %v900 = vadd.f32 0.0, %v899
        %v901 = vpop.f32.mrb[0].mxu0
        %902 = vmatprep.mubr.bf16.mxu0 0
        %903 = vmatmul.mubr.bf16.gmra.mrb[0].mxu0 %v719
        %v904 = vpop.f32.mrb[0].mxu0
        %v905 = vadd.f32 0.0, %v904
        %v906 = vpop.f32.mrb[0].mxu0
        %v907 = vpop.f32.mrb[0].mxu0
        %v908 = vadd.f32 0.0, %v907
        %v909 = vpop.f32.mrb[0].mxu0
        %910 = vmatprep.mubr.bf16.mxu0 0
        %911 = vmatmul.mubr.bf16.gmra.mrb[0].mxu0 %v720
        %v912 = vpop.f32.mrb[0].mxu0
        %v913 = vadd.f32 0.0, %v912
        %v914 = vpop.f32.mrb[0].mxu0
        %v915 = vpop.f32.mrb[0].mxu0
        %v916 = vadd.f32 0.0, %v915
        %v917 = vpop.f32.mrb[0].mxu0
        %918 = vmatprep.mubr.bf16.mxu0 0
        %919 = vmatmul.mubr.bf16.gmra.mrb[0].mxu0 %v721
        %v920 = vpop.f32.mrb[0].mxu0
        %v921 = vadd.f32 0.0, %v920
        %v922 = vpop.f32.mrb[0].mxu0
        %v923 = vpop.f32.mrb[0].mxu0
        %v924 = vadd.f32 0.0, %v923
        %v925 = vpop.f32.mrb[0].mxu0
        %926 = vmatprep.mubr.bf16.mxu0 0
        %927 = vmatmul.mubr.bf16.gmra.mrb[0].mxu0 %v722
        %v928 = vpop.f32.mrb[0].mxu0
        %v929 = vadd.f32 0.0, %v928
        %v930 = vpop.f32.mrb[0].mxu0
        %v931 = vpop.f32.mrb[0].mxu0
        %v932 = vadd.f32 0.0, %v931
        %v933 = vpop.f32.mrb[0].mxu0
        %934 = vmatprep.mubr.bf16.mxu0 0
        %935 = vmatmul.mubr.bf16.gmra.mrb[0].mxu0 %v723
        %v936 = vpop.f32.mrb[0].mxu0
        %v937 = vadd.f32 0.0, %v936
        %v938 = vpop.f32.mrb[0].mxu0
        %v939 = vpop.f32.mrb[0].mxu0
        %v940 = vadd.f32 0.0, %v939
        %v941 = vpop.f32.mrb[0].mxu0
        %942 = vmatprep.mubr.bf16.mxu0 0
        %943 = vmatmul.mubr.bf16.gmra.mrb[0].mxu0 %v724
        %v944 = vpop.f32.mrb[0].mxu0
        %v945 = vadd.f32 0.0, %v944
        %v946 = vpop.f32.mrb[0].mxu0
        %v947 = vpop.f32.mrb[0].mxu0
        %v948 = vadd.f32 0.0, %v947
        %v949 = vpop.f32.mrb[0].mxu0
        %950 = vdwg.mxu0
        %v951 = vadd.f32 %v582, %v825
        %v952 = vadd.f32 %v585, %v828
        %v953 = vadd.f32 %v590, %v833
        %v954 = vadd.f32 %v593, %v836
        %v955 = vadd.f32 %v598, %v841
        %v956 = vadd.f32 %v601, %v844
        %v957 = vadd.f32 %v606, %v849
        %v958 = vadd.f32 %v609, %v852
        %v959 = vadd.f32 %v614, %v857
        %v960 = vadd.f32 %v617, %v860
        %v961 = vadd.f32 %v622, %v865
        %v962 = vadd.f32 %v625, %v868
        %v963 = vadd.f32 %v630, %v873
        %v964 = vadd.f32 %v633, %v876
        %v965 = vadd.f32 %v638, %v881
        %v966 = vadd.f32 %v641, %v884
        %v967 = vadd.f32 %v646, %v889
        %v968 = vadd.f32 %v649, %v892
        %v969 = vadd.f32 %v654, %v897
        %v970 = vadd.f32 %v657, %v900
        %v971 = vadd.f32 %v662, %v905
        %v972 = vadd.f32 %v665, %v908
        %v973 = vadd.f32 %v670, %v913
        %v974 = vadd.f32 %v673, %v916
        %v975 = vadd.f32 %v678, %v921
        %v976 = vadd.f32 %v681, %v924
        %v977 = vadd.f32 %v686, %v929
        %v978 = vadd.f32 %v689, %v932
        %v979 = vadd.f32 %v694, %v937
        %v980 = vadd.f32 %v697, %v940
        %v981 = vadd.f32 %v702, %v945
        %v982 = vadd.f32 %v705, %v948
        %v983 = vld [vmem:[%s2] sm:$0x1]
        %v985 = vlaneseq
        %v986 = vshrl.u32 %v985, 7
        %v987 = vsub.s32 0, %v986
        %v988 = vrot.slane %v983, %v987
        %v990 = vadd.f32 %v951, %v988
        %v991 = vadd.f32 %v952, %v988
        %v992 = vadd.f32 %v953, %v988
        %v993 = vadd.f32 %v954, %v988
        %v994 = vadd.f32 %v955, %v988
        %v995 = vadd.f32 %v956, %v988
        %v996 = vadd.f32 %v957, %v988
        %v997 = vadd.f32 %v958, %v988
        %v998 = vadd.f32 %v959, %v988
        %v999 = vadd.f32 %v960, %v988
        %v1000 = vadd.f32 %v961, %v988
        %v1001 = vadd.f32 %v962, %v988
        %v1002 = vadd.f32 %v963, %v988
        %v1003 = vadd.f32 %v964, %v988
        %v1004 = vadd.f32 %v965, %v988
        %v1005 = vadd.f32 %v966, %v988
        %v1006 = vadd.f32 %v967, %v988
        %v1007 = vadd.f32 %v968, %v988
        %v1008 = vadd.f32 %v969, %v988
        %v1009 = vadd.f32 %v970, %v988
        %v1010 = vadd.f32 %v971, %v988
        %v1011 = vadd.f32 %v972, %v988
        %v1012 = vadd.f32 %v973, %v988
        %v1013 = vadd.f32 %v974, %v988
        %v1014 = vadd.f32 %v975, %v988
        %v1015 = vadd.f32 %v976, %v988
        %v1016 = vadd.f32 %v977, %v988
        %v1017 = vadd.f32 %v978, %v988
        %v1018 = vadd.f32 %v979, %v988
        %v1019 = vadd.f32 %v980, %v988
        %v1020 = vadd.f32 %v981, %v988
        %v1021 = vadd.f32 %v982, %v988
        %v1022 = vxor.u32 %v990, 2147483648
        %v1023 = vxor.u32 %v991, 2147483648
        %v1024 = vxor.u32 %v992, 2147483648
        %v1025 = vxor.u32 %v993, 2147483648
        %v1026 = vxor.u32 %v994, 2147483648
        %v1027 = vxor.u32 %v995, 2147483648
        %v1028 = vxor.u32 %v996, 2147483648
        %v1029 = vxor.u32 %v997, 2147483648
        %v1030 = vxor.u32 %v998, 2147483648
        %v1031 = vxor.u32 %v999, 2147483648
        %v1032 = vxor.u32 %v1000, 2147483648
        %v1033 = vxor.u32 %v1001, 2147483648
        %v1034 = vxor.u32 %v1002, 2147483648
        %v1035 = vxor.u32 %v1003, 2147483648
        %v1036 = vxor.u32 %v1004, 2147483648
        %v1037 = vxor.u32 %v1005, 2147483648
        %v1038 = vxor.u32 %v1006, 2147483648
        %v1039 = vxor.u32 %v1007, 2147483648
        %v1040 = vxor.u32 %v1008, 2147483648
        %v1041 = vxor.u32 %v1009, 2147483648
        %v1042 = vxor.u32 %v1010, 2147483648
        %v1043 = vxor.u32 %v1011, 2147483648
        %v1044 = vxor.u32 %v1012, 2147483648
        %v1045 = vxor.u32 %v1013, 2147483648
        %v1046 = vxor.u32 %v1014, 2147483648
        %v1047 = vxor.u32 %v1015, 2147483648
        %v1048 = vxor.u32 %v1016, 2147483648
        %v1049 = vxor.u32 %v1017, 2147483648
        %v1050 = vxor.u32 %v1018, 2147483648
        %v1051 = vxor.u32 %v1019, 2147483648
        %v1052 = vxor.u32 %v1020, 2147483648
        %v1053 = vxor.u32 %v1021, 2147483648
        %v1054 = vmul.f32 %v1022, 1.442695
        %v1055 = vpow.pop %v1054
        %v1056 = vmul.f32 %v1023, 1.442695
        %v1057 = vpow.pop %v1056
        %v1058 = vmul.f32 %v1024, 1.442695
        %v1059 = vpow.pop %v1058
        %v1060 = vmul.f32 %v1025, 1.442695
        %v1061 = vpow.pop %v1060
        %v1062 = vmul.f32 %v1026, 1.442695
        %v1063 = vpow.pop %v1062
        %v1064 = vmul.f32 %v1027, 1.442695
        %v1065 = vpow.pop %v1064
        %v1066 = vmul.f32 %v1028, 1.442695
        %v1067 = vpow.pop %v1066
        %v1068 = vmul.f32 %v1029, 1.442695
        %v1069 = vpow.pop %v1068
        %v1070 = vmul.f32 %v1030, 1.442695
        %v1071 = vpow.pop %v1070
        %v1072 = vmul.f32 %v1031, 1.442695
        %v1073 = vpow.pop %v1072
        %v1074 = vmul.f32 %v1032, 1.442695
        %v1075 = vpow.pop %v1074
        %v1076 = vmul.f32 %v1033, 1.442695
        %v1077 = vpow.pop %v1076
        %v1078 = vmul.f32 %v1034, 1.442695
        %v1079 = vpow.pop %v1078
        %v1080 = vmul.f32 %v1035, 1.442695
        %v1081 = vpow.pop %v1080
        %v1082 = vmul.f32 %v1036, 1.442695
        %v1083 = vpow.pop %v1082
        %v1084 = vmul.f32 %v1037, 1.442695
        %v1085 = vpow.pop %v1084
        %v1086 = vmul.f32 %v1038, 1.442695
        %v1087 = vpow.pop %v1086
        %v1088 = vmul.f32 %v1039, 1.442695
        %v1089 = vpow.pop %v1088
        %v1090 = vmul.f32 %v1040, 1.442695
        %v1091 = vpow.pop %v1090
        %v1092 = vmul.f32 %v1041, 1.442695
        %v1093 = vpow.pop %v1092
        %v1094 = vmul.f32 %v1042, 1.442695
        %v1095 = vpow.pop %v1094
        %v1096 = vmul.f32 %v1043, 1.442695
        %v1097 = vpow.pop %v1096
        %v1098 = vmul.f32 %v1044, 1.442695
        %v1099 = vpow.pop %v1098
        %v1100 = vmul.f32 %v1045, 1.442695
        %v1101 = vpow.pop %v1100
        %v1102 = vmul.f32 %v1046, 1.442695
        %v1103 = vpow.pop %v1102
        %v1104 = vmul.f32 %v1047, 1.442695
        %v1105 = vpow.pop %v1104
        %v1106 = vmul.f32 %v1048, 1.442695
        %v1107 = vpow.pop %v1106
        %v1108 = vmul.f32 %v1049, 1.442695
        %v1109 = vpow.pop %v1108
        %v1110 = vmul.f32 %v1050, 1.442695
        %v1111 = vpow.pop %v1110
        %v1112 = vmul.f32 %v1051, 1.442695
        %v1113 = vpow.pop %v1112
        %v1114 = vmul.f32 %v1052, 1.442695
        %v1115 = vpow.pop %v1114
        %v1116 = vmul.f32 %v1053, 1.442695
        %v1117 = vpow.pop %v1116
        %v1118 = vadd.f32 %v1055, 1.0
        %v1119 = vadd.f32 %v1057, 1.0
        %v1120 = vadd.f32 %v1059, 1.0
        %v1121 = vadd.f32 %v1061, 1.0
        %v1122 = vadd.f32 %v1063, 1.0
        %v1123 = vadd.f32 %v1065, 1.0
        %v1124 = vadd.f32 %v1067, 1.0
        %v1125 = vadd.f32 %v1069, 1.0
        %v1126 = vadd.f32 %v1071, 1.0
        %v1127 = vadd.f32 %v1073, 1.0
        %v1128 = vadd.f32 %v1075, 1.0
        %v1129 = vadd.f32 %v1077, 1.0
        %v1130 = vadd.f32 %v1079, 1.0
        %v1131 = vadd.f32 %v1081, 1.0
        %v1132 = vadd.f32 %v1083, 1.0
        %v1133 = vadd.f32 %v1085, 1.0
        %v1134 = vadd.f32 %v1087, 1.0
        %v1135 = vadd.f32 %v1089, 1.0
        %v1136 = vadd.f32 %v1091, 1.0
        %v1137 = vadd.f32 %v1093, 1.0
        %v1138 = vadd.f32 %v1095, 1.0
        %v1139 = vadd.f32 %v1097, 1.0
        %v1140 = vadd.f32 %v1099, 1.0
        %v1141 = vadd.f32 %v1101, 1.0
        %v1142 = vadd.f32 %v1103, 1.0
        %v1143 = vadd.f32 %v1105, 1.0
        %v1144 = vadd.f32 %v1107, 1.0
        %v1145 = vadd.f32 %v1109, 1.0
        %v1146 = vadd.f32 %v1111, 1.0
        %v1147 = vadd.f32 %v1113, 1.0
        %v1148 = vadd.f32 %v1115, 1.0
        %v1149 = vadd.f32 %v1117, 1.0
        %v1150 = vrcp.pop %v1118
        %v1151 = vmul.f32 1.0, %v1150
        %v1152 = vrcp.pop %v1119
        %v1153 = vmul.f32 1.0, %v1152
        %v1154 = vrcp.pop %v1120
        %v1155 = vmul.f32 1.0, %v1154
        %v1156 = vrcp.pop %v1121
        %v1157 = vmul.f32 1.0, %v1156
        %v1158 = vrcp.pop %v1122
        %v1159 = vmul.f32 1.0, %v1158
        %v1160 = vrcp.pop %v1123
        %v1161 = vmul.f32 1.0, %v1160
        %v1162 = vrcp.pop %v1124
        %v1163 = vmul.f32 1.0, %v1162
        %v1164 = vrcp.pop %v1125
        %v1165 = vmul.f32 1.0, %v1164
        %v1166 = vrcp.pop %v1126
        %v1167 = vmul.f32 1.0, %v1166
        %v1168 = vrcp.pop %v1127
        %v1169 = vmul.f32 1.0, %v1168
        %v1170 = vrcp.pop %v1128
        %v1171 = vmul.f32 1.0, %v1170
        %v1172 = vrcp.pop %v1129
        %v1173 = vmul.f32 1.0, %v1172
        %v1174 = vrcp.pop %v1130
        %v1175 = vmul.f32 1.0, %v1174
        %v1176 = vrcp.pop %v1131
        %v1177 = vmul.f32 1.0, %v1176
        %v1178 = vrcp.pop %v1132
        %v1179 = vmul.f32 1.0, %v1178
        %v1180 = vrcp.pop %v1133
        %v1181 = vmul.f32 1.0, %v1180
        %v1182 = vrcp.pop %v1134
        %v1183 = vmul.f32 1.0, %v1182
        %v1184 = vrcp.pop %v1135
        %v1185 = vmul.f32 1.0, %v1184
        %v1186 = vrcp.pop %v1136
        %v1187 = vmul.f32 1.0, %v1186
        %v1188 = vrcp.pop %v1137
        %v1189 = vmul.f32 1.0, %v1188
        %v1190 = vrcp.pop %v1138
        %v1191 = vmul.f32 1.0, %v1190
        %v1192 = vrcp.pop %v1139
        %v1193 = vmul.f32 1.0, %v1192
        %v1194 = vrcp.pop %v1140
        %v1195 = vmul.f32 1.0, %v1194
        %v1196 = vrcp.pop %v1141
        %v1197 = vmul.f32 1.0, %v1196
        %v1198 = vrcp.pop %v1142
        %v1199 = vmul.f32 1.0, %v1198
        %v1200 = vrcp.pop %v1143
        %v1201 = vmul.f32 1.0, %v1200
        %v1202 = vrcp.pop %v1144
        %v1203 = vmul.f32 1.0, %v1202
        %v1204 = vrcp.pop %v1145
        %v1205 = vmul.f32 1.0, %v1204
        %v1206 = vrcp.pop %v1146
        %v1207 = vmul.f32 1.0, %v1206
        %v1208 = vrcp.pop %v1147
        %v1209 = vmul.f32 1.0, %v1208
        %v1210 = vrcp.pop %v1148
        %v1211 = vmul.f32 1.0, %v1210
        %v1212 = vrcp.pop %v1149
        %v1213 = vmul.f32 1.0, %v1212
        %v1214 = vmul.f32 %v990, %v1151
        %v1215 = vmul.f32 %v991, %v1153
        %v1216 = vmul.f32 %v992, %v1155
        %v1217 = vmul.f32 %v993, %v1157
        %v1218 = vmul.f32 %v994, %v1159
        %v1219 = vmul.f32 %v995, %v1161
        %v1220 = vmul.f32 %v996, %v1163
        %v1221 = vmul.f32 %v997, %v1165
        %v1222 = vmul.f32 %v998, %v1167
        %v1223 = vmul.f32 %v999, %v1169
        %v1224 = vmul.f32 %v1000, %v1171
        %v1225 = vmul.f32 %v1001, %v1173
        %v1226 = vmul.f32 %v1002, %v1175
        %v1227 = vmul.f32 %v1003, %v1177
        %v1228 = vmul.f32 %v1004, %v1179
        %v1229 = vmul.f32 %v1005, %v1181
        %v1230 = vmul.f32 %v1006, %v1183
        %v1231 = vmul.f32 %v1007, %v1185
        %v1232 = vmul.f32 %v1008, %v1187
        %v1233 = vmul.f32 %v1009, %v1189
        %v1234 = vmul.f32 %v1010, %v1191
        %v1235 = vmul.f32 %v1011, %v1193
        %v1236 = vmul.f32 %v1012, %v1195
        %v1237 = vmul.f32 %v1013, %v1197
        %v1238 = vmul.f32 %v1014, %v1199
        %v1239 = vmul.f32 %v1015, %v1201
        %v1240 = vmul.f32 %v1016, %v1203
        %v1241 = vmul.f32 %v1017, %v1205
        %v1242 = vmul.f32 %v1018, %v1207
        %v1243 = vmul.f32 %v1019, %v1209
        %v1244 = vmul.f32 %v1020, %v1211
        %v1245 = vmul.f32 %v1021, %v1213
        %v1246 = vpack.c.bf16 %v1215, %v1214
        %v1247 = vpack.c.bf16 %v1217, %v1216
        %v1248 = vpack.c.bf16 %v1219, %v1218
        %v1249 = vpack.c.bf16 %v1221, %v1220
        %v1250 = vpack.c.bf16 %v1223, %v1222
        %v1251 = vpack.c.bf16 %v1225, %v1224
        %v1252 = vpack.c.bf16 %v1227, %v1226
        %v1253 = vpack.c.bf16 %v1229, %v1228
        %v1254 = vpack.c.bf16 %v1231, %v1230
        %v1255 = vpack.c.bf16 %v1233, %v1232
        %v1256 = vpack.c.bf16 %v1235, %v1234
        %v1257 = vpack.c.bf16 %v1237, %v1236
        %v1258 = vpack.c.bf16 %v1239, %v1238
        %v1259 = vpack.c.bf16 %v1241, %v1240
        %v1260 = vpack.c.bf16 %v1243, %v1242
        %v1261 = vpack.c.bf16 %v1245, %v1244
        %v1278 = vunpack.c.l.b16 %v1246
        %v1279 = vunpack.c.h.b16 %v1246
        %v1280 = vunpack.c.l.b16 %v1247
        %v1281 = vunpack.c.h.b16 %v1247
        %v1282 = vunpack.c.l.b16 %v1248
        %v1283 = vunpack.c.h.b16 %v1248
        %v1284 = vunpack.c.l.b16 %v1249
        %v1285 = vunpack.c.h.b16 %v1249
        %v1286 = vunpack.c.l.b16 %v1250
        %v1287 = vunpack.c.h.b16 %v1250
        %v1288 = vunpack.c.l.b16 %v1251
        %v1289 = vunpack.c.h.b16 %v1251
        %v1290 = vunpack.c.l.b16 %v1252
        %v1291 = vunpack.c.h.b16 %v1252
        %v1292 = vunpack.c.l.b16 %v1253
        %v1293 = vunpack.c.h.b16 %v1253
        %v1294 = vunpack.c.l.b16 %v1254
        %v1295 = vunpack.c.h.b16 %v1254
        %v1296 = vunpack.c.l.b16 %v1255
        %v1297 = vunpack.c.h.b16 %v1255
        %v1298 = vunpack.c.l.b16 %v1256
        %v1299 = vunpack.c.h.b16 %v1256
        %v1300 = vunpack.c.l.b16 %v1257
        %v1301 = vunpack.c.h.b16 %v1257
        %v1302 = vunpack.c.l.b16 %v1258
        %v1303 = vunpack.c.h.b16 %v1258
        %v1304 = vunpack.c.l.b16 %v1259
        %v1305 = vunpack.c.h.b16 %v1259
        %v1306 = vunpack.c.l.b16 %v1260
        %v1307 = vunpack.c.h.b16 %v1260
        %v1308 = vunpack.c.l.b16 %v1261
        %v1309 = vunpack.c.h.b16 %v1261
        %v1310 = vpack.c.b16 %v1278, %v1278
        %v1311 = vpack.c.b16 %v1279, %v1279
        %v1312 = vpack.c.b16 %v1280, %v1280
        %v1313 = vpack.c.b16 %v1281, %v1281
        %v1314 = vpack.c.b16 %v1282, %v1282
        %v1315 = vpack.c.b16 %v1283, %v1283
        %v1316 = vpack.c.b16 %v1284, %v1284
        %v1317 = vpack.c.b16 %v1285, %v1285
        %v1318 = vpack.c.b16 %v1286, %v1286
        %v1319 = vpack.c.b16 %v1287, %v1287
        %v1320 = vpack.c.b16 %v1288, %v1288
        %v1321 = vpack.c.b16 %v1289, %v1289
        %v1322 = vpack.c.b16 %v1290, %v1290
        %v1323 = vpack.c.b16 %v1291, %v1291
        %v1324 = vpack.c.b16 %v1292, %v1292
        %v1325 = vpack.c.b16 %v1293, %v1293
        %v1326 = vpack.c.b16 %v1294, %v1294
        %v1327 = vpack.c.b16 %v1295, %v1295
        %v1328 = vpack.c.b16 %v1296, %v1296
        %v1329 = vpack.c.b16 %v1297, %v1297
        %v1330 = vpack.c.b16 %v1298, %v1298
        %v1331 = vpack.c.b16 %v1299, %v1299
        %v1332 = vpack.c.b16 %v1300, %v1300
        %v1333 = vpack.c.b16 %v1301, %v1301
        %v1334 = vpack.c.b16 %v1302, %v1302
        %v1335 = vpack.c.b16 %v1303, %v1303
        %v1336 = vpack.c.b16 %v1304, %v1304
        %v1337 = vpack.c.b16 %v1305, %v1305
        %v1338 = vpack.c.b16 %v1306, %v1306
        %v1339 = vpack.c.b16 %v1307, %v1307
        %v1340 = vpack.c.b16 %v1308, %v1308
        %v1341 = vpack.c.b16 %v1309, %v1309
        %1374 = vst [vmem:[%s151] sm:$0xf] %v1310
        %1375 = vst [vmem:[%s151 + $0x4] sm:$0xf] %v1311
        %1376 = vst [vmem:[%s151 + $0x8] sm:$0xf] %v1312
        %1377 = vst [vmem:[%s151 + $0xc] sm:$0xf] %v1313
        %1378 = vst [vmem:[%s151 + $0x10] sm:$0xf] %v1314
        %1379 = vst [vmem:[%s151 + $0x14] sm:$0xf] %v1315
        %1380 = vst [vmem:[%s151 + $0x18] sm:$0xf] %v1316
        %1381 = vst [vmem:[%s151 + $0x1c] sm:$0xf] %v1317
        %1382 = vst [vmem:[%s151 + $0x20] sm:$0xf] %v1318
        %1383 = vst [vmem:[%s151 + $0x24] sm:$0xf] %v1319
        %1384 = vst [vmem:[%s151 + $0x28] sm:$0xf] %v1320
        %1385 = vst [vmem:[%s151 + $0x2c] sm:$0xf] %v1321
        %1386 = vst [vmem:[%s151 + $0x30] sm:$0xf] %v1322
        %1387 = vst [vmem:[%s151 + $0x34] sm:$0xf] %v1323
        %1388 = vst [vmem:[%s151 + $0x38] sm:$0xf] %v1324
        %1389 = vst [vmem:[%s151 + $0x3c] sm:$0xf] %v1325
        %1390 = vst [vmem:[%s151 + $0x40] sm:$0xf] %v1326
        %1391 = vst [vmem:[%s151 + $0x44] sm:$0xf] %v1327
        %1392 = vst [vmem:[%s151 + $0x48] sm:$0xf] %v1328
        %1393 = vst [vmem:[%s151 + $0x4c] sm:$0xf] %v1329
        %1394 = vst [vmem:[%s151 + $0x50] sm:$0xf] %v1330
        %1395 = vst [vmem:[%s151 + $0x54] sm:$0xf] %v1331
        %1396 = vst [vmem:[%s151 + $0x58] sm:$0xf] %v1332
        %1397 = vst [vmem:[%s151 + $0x5c] sm:$0xf] %v1333
        %1398 = vst [vmem:[%s151 + $0x60] sm:$0xf] %v1334
        %1399 = vst [vmem:[%s151 + $0x64] sm:$0xf] %v1335
        %1400 = vst [vmem:[%s151 + $0x68] sm:$0xf] %v1336
        %1401 = vst [vmem:[%s151 + $0x6c] sm:$0xf] %v1337
        %1402 = vst [vmem:[%s151 + $0x70] sm:$0xf] %v1338
        %1403 = vst [vmem:[%s151 + $0x74] sm:$0xf] %v1339
        %1404 = vst [vmem:[%s151 + $0x78] sm:$0xf] %v1340
        %1405 = vst [vmem:[%s151 + $0x7c] sm:$0xf] %v1341
        %s1406 = sand.u32 %s82, 1
        %s1407 = scalar_lea.sflag [#allocation6], %s1406
        %s1408 = sand.u32 %s82, 1
        %s1409 = smul.addr %s1408, 128
        %s1410 = scalar_lea.vmem [#allocation7], %s1409
        // Predicated region
        $region49: #{tpu_custom_call.1} parent=27 // pred_check
          %p1411 = pneg %p92
        $region50: #{tpu_custom_call.1} parent=27 // pred_check_branch
          %1413 = sbr.rel (%p1411) target = $region52
        $region51: #{tpu_custom_call.1} parent=27 // pred_region
          %s1414 = smul.u32 16, %s23
          %s1416 = ssub.s32 2048, 2048
          %1417 = vsyncadd %s1407, %s1416
          %s1418 = smul.addr %s1414, 2
          %s1419 = smul.addr %s22, 32
          %s1420 = sadd.s32 %s1418, %s1419
          %s1421 = smul.addr %s1420, 64
          %s1422 = scalar_lea.hbm %s3, %s1421
          %s1423 = sshll.u32 %s1410, 4
          %s1424 = int_to_ptr.vmem [resolvable:$true] %s1423
          %1429 = dma.vmem_to_hbm [thread:$0]  %s1424, 2048, %s1422, %s1407, 64, 64, 4
        $region52: #{tpu_custom_call.1} parent=27 // pred_fallthru
          _
      $region28: #{tpu_custom_call.1} parent=5 // pred_fallthru
        _
      %p1430 = scmp.le.s32.totalorder 2, %s13
      // Predicated region
      $region53: #{tpu_custom_call.1} parent=5 // pred_check
        %p1431 = pneg %p1430
      $region54: #{tpu_custom_call.1} parent=5 // pred_check_branch
        %1433 = sbr.rel (%p1431) target = $region56
      $region55: #{tpu_custom_call.1} parent=5 // pred_region
        %s1434 = ssub.s32 %s13, 2
        // Predicated region
        $region57: #{tpu_custom_call.1} parent=55 // pred_check
          %p1435 = pneg %p98
        $region58: #{tpu_custom_call.1} parent=55 // pred_check_branch
          %1437 = sbr.rel (%p1435) target = $region60
        $region59: #{tpu_custom_call.1} parent=55 // pred_region
          %s1438 = sand.u32 %s83, 1
          %s1439 = scalar_lea.sflag [#allocation6], %s1438
          %s1440 = sand.u32 %s83, 1
          %s1441 = smul.addr %s1440, 128
          %s1442 = scalar_lea.vmem [#allocation7], %s1441
          %1443 = dma.done %s1439, 2048
        $region60: #{tpu_custom_call.1} parent=55 // pred_fallthru
          _
      $region56: #{tpu_custom_call.1} parent=5 // pred_fallthru
        _
    $region6: #{tpu_custom_call.1} parent=1 // loop_footer
      %s17 = sadd.s32 1, %s13
    $region7: #{tpu_custom_call.1} parent=1 // loop_footer_branch
      %12 = sbr.rel target = $region3
    $region8: #{tpu_custom_call.1} parent=1 // loop_exit
      _
    %1444 = vsyncpa [#allocation5], 1
    %s1445 = scalar_lea.sflag [#allocation5], 1
    %1446 = vsyncpa %s1445, 1
    %1447 = vsyncpa [#allocation6], 1
    %s1448 = scalar_lea.sflag [#allocation6], 1
    %1449 = vsyncpa %s1448, 1
  %1450 = vsyncmov [#allocation3]
  %s1451 = vpop.sfrf %1450
  %p1452 = scmp.eq.s32.totalorder %s1451, 0
  %p1453 = pneg %p1452
  %1455 = shalt.err (%p1453)
  %s1456 = scalar_lea.sflag [#allocation3], 1
  %1457 = vsyncmov %s1456
  %s1458 = vpop.sfrf %1457
  %p1459 = scmp.eq.s32.totalorder %s1458, 0
  %p1460 = pneg %p1459
  %1462 = shalt.err (%p1460)

</llo_original>
